<compile_context>
chip_gen: v6e
topology: v6e:2x2x1
jax: 0.10.0
libtpu: 0.0.40
codegen_flags: <defaults>
</compile_context>

<pallas_src>
import math
import functools

import jax
import jax.numpy as jnp
from jax.experimental import pallas as pl
from jax.experimental.pallas import tpu as pltpu


def _attention_block_kernel(*refs, scale, has_prev):
    """One (batch, q-tile) block, all heads at once.

    Views seen by the kernel (batch dim squeezed by the BlockSpecs):
      q_ref              : (H, Tq, hd)
      k_ref / v_ref      : (H, Lk, hd)
      mask_ref           : (1, Lk) or (Tq, Lk)
      ps_ref             : (H, Tq, Lk)       (only when has_prev)
      wm1_ref            : (H, hd, D)  = minus.weight.T[:D]  split per head
      wpm_ref            : (H, hd, D)  = (proj.weight.T @ minus.weight.T[D:])
      gamma_ref/beta_ref : (1, D)
      out_ref            : (Tq, D)
      sc_ref             : (H, Tq, Lk)
    """
    if has_prev:
        (c_ref, q_ref, k_ref, v_ref, mask_ref, ps_ref,
         wm1_ref, wpm_ref, gamma_ref, beta_ref, out_ref, sc_ref) = refs
    else:
        (q_ref, k_ref, v_ref, mask_ref,
         wm1_ref, wpm_ref, gamma_ref, beta_ref, out_ref, sc_ref) = refs

    qh = q_ref[...]                                     # (H, Tq, hd)
    kh = k_ref[...]                                     # (H, Lk, hd)
    vh = v_ref[...]                                     # (H, Lk, hd)

    # ---- scores: head-batched, contraction over head_dim (no transpose) ----
    s = jnp.einsum('hqd,hkd->hqk', qh, kh,
                   preferred_element_type=jnp.float32) * scale       # (H,Tq,Lk)
    if has_prev:
        s = s + c_ref[0, 0] * ps_ref[...]
    # mask penalty: (1,Lk)/(Tq,Lk) row broadcast in-register (exact PyTorch form).
    s = s - 1e8 * (1.0 - mask_ref[...])
    sc_ref[...] = s.astype(sc_ref.dtype)                # returned scores

    # ---- softmax over keys (f32) ----
    m = jnp.max(s, axis=-1, keepdims=True)
    p = jnp.exp(s - m)
    inv = pl.reciprocal(jnp.sum(p, axis=-1, keepdims=True), approx=True)
    att = p * inv                                       # (H, Tq, Lk)

    # ---- context: head-batched att @ v ----
    ctx = jnp.einsum('hqk,hkd->hqd', att.astype(vh.dtype), vh,
                     preferred_element_type=jnp.float32)             # (H,Tq,hd)

    # ---- minus(cat(q, proj(ctx))), concat-free and proj-folded:
    #      y = q @ Wm1 + ctx @ (Wp^T @ Wm2), computed head-batched then
    #      reduced over the head axis. ----
    yq = jnp.einsum('hqd,hde->hqe', qh, wm1_ref[...],
                    preferred_element_type=jnp.float32)              # (H,Tq,D)
    yc = jnp.einsum('hqd,hde->hqe', ctx.astype(wpm_ref.dtype), wpm_ref[...],
                    preferred_element_type=jnp.float32)              # (H,Tq,D)
    y = jnp.sum(yq + yc, axis=0)                                     # (Tq, D)

    # ---- LayerNorm(dim) ----
    mean = jnp.mean(y, axis=-1, keepdims=True)
    var = jnp.mean(jnp.square(y - mean), axis=-1, keepdims=True)
    yn = (y - mean) * jax.lax.rsqrt(var + 1e-5)
    out_ref[...] = (yn * gamma_ref[...] + beta_ref[...]).astype(out_ref.dtype)


def _pick_q_tile(Lq, n_heads, Lk, budget_bytes=2 << 20):
    """Largest Lq tile (Lq itself, or a multiple-of-8 divisor of Lq) whose
    per-block (H, Tq, Lk) f32 score slab stays within `budget_bytes`."""
    cap = max(8, budget_bytes // (n_heads * Lk * 4))
    if Lq <= cap:
        return Lq
    divs = [t for t in range(8, min(cap, Lq) + 1, 8) if Lq % t == 0]
    return max(divs) if divs else Lq


def attention_block(q, k, v, mask, prev_scores, params, *, n_heads,
                    q_tile=None, mxu_dtype=None):
    """Pallas implementation of Attention_Block.forward.  Returns (out, scores).

    mxu_dtype: optionally jnp.bfloat16 on v6e/v7x to feed the MXU bf16 operands
               (f32 accumulation); None keeps everything f32.
    """
    B, Lq, D = q.shape
    Lk = k.shape[1]
    assert D % n_heads == 0
    H, hd = n_heads, D // n_heads

    if q_tile is None:
        q_tile = _pick_q_tile(Lq, H, Lk)
    assert Lq % q_tile == 0
    n_q = Lq // q_tile

    # --- head split done once, wrapper side (layout plumbing, not per head) ---
    def split_heads(x, L):
        return x.astype(jnp.float32).reshape(B, L, H, hd).transpose(0, 2, 1, 3)

    qh = split_heads(q, Lq)                              # (B, H, Lq, hd)
    kh = split_heads(k, Lk)                              # (B, H, Lk, hd)
    vh = split_heads(v, Lk)

    # --- weights: split `minus` and fold `proj` into its second half ---
    wpT = params["w_proj"].astype(jnp.float32).T         # (D, D)
    wmT = params["w_minus"].astype(jnp.float32).T        # (2D, D)
    wm1 = wmT[:D]                                        # multiplies q
    wpm = jnp.dot(wpT, wmT[D:], precision='highest')     # multiplies ctx
    wm1_h = wm1.reshape(H, hd, D)
    wpm_h = wpm.reshape(H, hd, D)
    gamma = params["ln_gamma"].astype(jnp.float32).reshape(1, D)
    beta = params["ln_beta"].astype(jnp.float32).reshape(1, D)

    if mxu_dtype is not None:
        qh, kh, vh = (t.astype(mxu_dtype) for t in (qh, kh, vh))
        wm1_h, wpm_h = wm1_h.astype(mxu_dtype), wpm_h.astype(mxu_dtype)

    # --- mask: never materialize a (B, Lq, Lk) broadcast in HBM ---
    if mask is None:
        mask_in = jnp.ones((B, 1, Lk), jnp.float32)
        mask_spec = pl.BlockSpec((None, 1, Lk), lambda b, i: (b, 0, 0))
    elif mask.ndim == 2:
        mask_in = mask.astype(jnp.float32).reshape(B, 1, Lk)
        mask_spec = pl.BlockSpec((None, 1, Lk), lambda b, i: (b, 0, 0))
    else:  # (B, Lq, Lk) per-query mask passes through, tiled on Lq
        mask_in = mask.astype(jnp.float32)
        mask_spec = pl.BlockSpec((None, q_tile, Lk), lambda b, i: (b, i, 0))

    has_prev = prev_scores is not None

    in_specs, args = [], []
    if has_prev:
        c = params["c"].astype(jnp.float32).reshape(1, 1)
        in_specs.append(pl.BlockSpec(memory_space=pltpu.MemorySpace.SMEM))
        args.append(c)
    in_specs += [
        pl.BlockSpec((None, H, q_tile, hd), lambda b, i: (b, 0, i, 0)),   # q heads
        pl.BlockSpec((None, H, Lk, hd), lambda b, i: (b, 0, 0, 0)),       # k heads (resident over q tiles)
        pl.BlockSpec((None, H, Lk, hd), lambda b, i: (b, 0, 0, 0)),       # v heads (resident over q tiles)
        mask_spec,
    ]
    args += [qh, kh, vh, mask_in]
    if has_prev:
        in_specs.append(
            pl.BlockSpec((None, H, q_tile, Lk), lambda b, i: (b, 0, i, 0)))
        args.append(prev_scores.astype(jnp.float32))
    in_specs += [
        pl.BlockSpec((H, hd, D), lambda b, i: (0, 0, 0)),                 # wm1 (resident)
        pl.BlockSpec((H, hd, D), lambda b, i: (0, 0, 0)),                 # wpm (resident)
        pl.BlockSpec((1, D), lambda b, i: (0, 0)),                        # ln gamma
        pl.BlockSpec((1, D), lambda b, i: (0, 0)),                        # ln beta
    ]
    args += [wm1_h, wpm_h, gamma, beta]

    out_specs = [
        pl.BlockSpec((None, q_tile, D), lambda b, i: (b, i, 0)),
        pl.BlockSpec((None, H, q_tile, Lk), lambda b, i: (b, 0, i, 0)),
    ]
    out_shape = (jax.ShapeDtypeStruct((B, Lq, D), jnp.float32),
                 jax.ShapeDtypeStruct((B, H, Lq, Lk), jnp.float32))

    kernel = functools.partial(_attention_block_kernel,
                               scale=1.0 / math.sqrt(hd), has_prev=has_prev)

    grid_spec = pltpu.PrefetchScalarGridSpec(
        num_scalar_prefetch=0,
        grid=(B, n_q),
        in_specs=in_specs,
        out_specs=out_specs,
    )

    out, scores = pl.pallas_call(
        kernel,
        out_shape=out_shape,
        grid_spec=grid_spec,
        compiler_params=pltpu.CompilerParams(
            dimension_semantics=("parallel", "parallel"),
            vmem_limit_bytes=64 * 1024 * 1024),
    )(*args)
    return out, scores


def reference(q, k, v, mask, prev_scores, params, n_heads):
    """Pure-JAX mirror of the PyTorch forward, for correctness check."""
    B, Lq, D = q.shape
    hd = D // n_heads
    split = lambda x: x.reshape(x.shape[0], -1, n_heads, hd).transpose(0, 2, 1, 3)
    qh, kh, vh = split(q), split(k), split(v)
    s = jnp.einsum('bhqd,bhkd->bhqk', qh, kh, precision='highest') / math.sqrt(hd)
    if prev_scores is not None:
        s = s + params['c'][0] * prev_scores
    if mask is not None:
        m = mask.astype(jnp.float32)
        m = m[:, None, None, :] if m.ndim == 2 else m[:, None, :, :]
        s = s - 1e8 * (1.0 - m)
    att = jax.nn.softmax(s, axis=-1)
    ctx = jnp.einsum('bhqk,bhkd->bhqd', att, vh, precision='highest')
    ctx = ctx.transpose(0, 2, 1, 3).reshape(B, Lq, D)
    x = jnp.einsum('bli,oi->blo', ctx, params['w_proj'], precision='highest')
    qc = jnp.concatenate([q, x], axis=-1)
    y = jnp.einsum('blf,of->blo', qc, params['w_minus'], precision='highest')
    mean = y.mean(-1, keepdims=True)
    var = jnp.square(y - mean).mean(-1, keepdims=True)
    out = (y - mean) / jnp.sqrt(var + 1e-5) * params['ln_gamma'] + params['ln_beta']
    return out, s


if __name__ == "__main__":
    B, L, D, H = 2, 8, 32, 4        # batch, seq, dim, n_heads  (head_dim = 8)
    key = jax.random.PRNGKey(0)
    ks = jax.random.split(key, 8)

    q = jax.random.normal(ks[0], (B, L, D), jnp.float32)
    k = jax.random.normal(ks[1], (B, L, D), jnp.float32)
    v = jax.random.normal(ks[2], (B, L, D), jnp.float32)
    mask = (jax.random.uniform(ks[3], (B, L)) > 0.2).astype(jnp.float32)
    mask = mask.at[:, 0].set(1.0)   # at least one attendable key per row
    prev_scores = jax.random.normal(ks[4], (B, H, L, L), jnp.float32)

    params = {
        # nn.Linear(dim, dim, bias=False).weight -> (out, in)
        "w_proj": 0.1 * jax.random.normal(ks[5], (D, D), jnp.float32),
        # nn.Linear(2*dim, dim, bias=False).weight -> (dim, 2*dim)
        "w_minus": 0.1 * jax.random.normal(ks[6], (D, 2 * D), jnp.float32),
        # nn.LayerNorm(dim) default affine init
        "ln_gamma": jnp.ones((D,), jnp.float32),
        "ln_beta": jnp.zeros((D,), jnp.float32),
        # module inits c=0; nonzero here so the `c * scores` path is exercised
        "c": jnp.array([0.25], jnp.float32),
    }

    # Path 1: with previous scores (c * scores term active).
    out, scores = attention_block(q, k, v, mask, prev_scores, params, n_heads=H)
    jax.block_until_ready((out, scores))
    ref_out, ref_scores = reference(q, k, v, mask, prev_scores, params, H)
    # atol bounded by the approx softmax reciprocal (EUP) path.
    assert jnp.allclose(out, ref_out, atol=5e-3, rtol=2e-3), \
        float(jnp.max(jnp.abs(out - ref_out)))
    assert jnp.allclose(scores, ref_scores, atol=1e-2, rtol=1e-3)

    # Path 2: specialized prev_scores=None variant (no zeros tensor in HBM).
    out0, scores0 = attention_block(q, k, v, mask, None, params, n_heads=H)
    jax.block_until_ready((out0, scores0))
    ref_out0, ref_scores0 = reference(q, k, v, mask, None, params, H)
    assert jnp.allclose(out0, ref_out0, atol=5e-3, rtol=2e-3), \
        float(jnp.max(jnp.abs(out0 - ref_out0)))
    assert jnp.allclose(scores0, ref_scores0, atol=1e-2, rtol=1e-3)

    print("KERNEL_OK")
</pallas_src>

<mosaic_0001>
module attributes {stable_mosaic.version = 11 : i64} {
  func.func @_attention_block_kernel(%arg0: i32, %arg1: i32, %arg2: memref<1x1xf32, #tpu.memory_space<smem>>, %arg3: memref<1x4x8x8xf32, #tpu.memory_space<vmem>>, %arg4: memref<1x4x8x8xf32, #tpu.memory_space<vmem>>, %arg5: memref<1x4x8x8xf32, #tpu.memory_space<vmem>>, %arg6: memref<1x1x8xf32, #tpu.memory_space<vmem>>, %arg7: memref<1x4x8x8xf32, #tpu.memory_space<vmem>>, %arg8: memref<4x8x32xf32, #tpu.memory_space<vmem>>, %arg9: memref<4x8x32xf32, #tpu.memory_space<vmem>>, %arg10: memref<1x32xf32, #tpu.memory_space<vmem>>, %arg11: memref<1x32xf32, #tpu.memory_space<vmem>>, %arg12: memref<1x8x32xf32, #tpu.memory_space<vmem>>, %arg13: memref<1x4x8x8xf32, #tpu.memory_space<vmem>>) attributes {dimension_semantics = [#tpu.dimension_semantics<parallel>, #tpu.dimension_semantics<parallel>], iteration_bounds = array<i64: 2, 1>, scalar_prefetch = 0 : i64, scratch_operands = 0 : i64, tpu.core_type = #tpu.core_type<tc>, window_params = [{transform_indices = @transform_0, window_bounds = array<i64: 1, 1>}, {transform_indices = @transform_1, window_bounds = array<i64: 1, 4, 8, 8>}, {transform_indices = @transform_2, window_bounds = array<i64: 1, 4, 8, 8>}, {transform_indices = @transform_3, window_bounds = array<i64: 1, 4, 8, 8>}, {transform_indices = @transform_4, window_bounds = array<i64: 1, 1, 8>}, {transform_indices = @transform_5, window_bounds = array<i64: 1, 4, 8, 8>}, {pipeline_mode = #tpu.pipeline_mode<synchronous>, transform_indices = @transform_6, window_bounds = array<i64: 4, 8, 32>}, {pipeline_mode = #tpu.pipeline_mode<synchronous>, transform_indices = @transform_7, window_bounds = array<i64: 4, 8, 32>}, {pipeline_mode = #tpu.pipeline_mode<synchronous>, transform_indices = @transform_8, window_bounds = array<i64: 1, 32>}, {pipeline_mode = #tpu.pipeline_mode<synchronous>, transform_indices = @transform_9, window_bounds = array<i64: 1, 32>}, {transform_indices = @transform_10, window_bounds = array<i64: 1, 8, 32>}, {transform_indices = @transform_11, window_bounds = array<i64: 1, 4, 8, 8>}]} {
    %c0 = arith.constant 0 : index
    %c0_0 = arith.constant 0 : index
    %c0_1 = arith.constant 0 : index
    %c0_2 = arith.constant 0 : index
    %0 = vector.load %arg3[%c0, %c0_0, %c0_1, %c0_2] : memref<1x4x8x8xf32, #tpu.memory_space<vmem>>, vector<1x4x8x8xf32>
    %1 = vector.shape_cast %0 : vector<1x4x8x8xf32> to vector<4x8x8xf32>
    %c0_3 = arith.constant 0 : index
    %c0_4 = arith.constant 0 : index
    %c0_5 = arith.constant 0 : index
    %c0_6 = arith.constant 0 : index
    %2 = vector.load %arg4[%c0_3, %c0_4, %c0_5, %c0_6] : memref<1x4x8x8xf32, #tpu.memory_space<vmem>>, vector<1x4x8x8xf32>
    %3 = vector.shape_cast %2 : vector<1x4x8x8xf32> to vector<4x8x8xf32>
    %c0_7 = arith.constant 0 : index
    %c0_8 = arith.constant 0 : index
    %c0_9 = arith.constant 0 : index
    %c0_10 = arith.constant 0 : index
    %4 = vector.load %arg5[%c0_7, %c0_8, %c0_9, %c0_10] : memref<1x4x8x8xf32, #tpu.memory_space<vmem>>, vector<1x4x8x8xf32>
    %5 = vector.shape_cast %4 : vector<1x4x8x8xf32> to vector<4x8x8xf32>
    "tpu.trace_start"() <{level = 10 : i32, message = "hqd,hkd->hqk"}> : () -> ()
    %cst = arith.constant dense<0.000000e+00> : vector<4x8x8xf32>
    %6 = tpu.matmul %1, %3, %cst {dimension_numbers = #tpu.dot_dimension_numbers<[2], [2], [1], [1], [0, 0, 0, 1, 1, 1], [0], [0]>} : vector<4x8x8xf32>, vector<4x8x8xf32>, vector<4x8x8xf32> -> vector<4x8x8xf32>
    "tpu.trace_stop"() : () -> ()
    %cst_11 = arith.constant 0.353553385 : f32
    %7 = vector.broadcast %cst_11 : f32 to vector<4x8x8xf32>
    %8 = arith.mulf %6, %7 : vector<4x8x8xf32>
    %c0_12 = arith.constant 0 : index
    %c0_13 = arith.constant 0 : index
    %9 = memref.load %arg2[%c0_12, %c0_13] : memref<1x1xf32, #tpu.memory_space<smem>>
    %c0_14 = arith.constant 0 : index
    %c0_15 = arith.constant 0 : index
    %c0_16 = arith.constant 0 : index
    %c0_17 = arith.constant 0 : index
    %10 = vector.load %arg7[%c0_14, %c0_15, %c0_16, %c0_17] : memref<1x4x8x8xf32, #tpu.memory_space<vmem>>, vector<1x4x8x8xf32>
    %11 = vector.shape_cast %10 : vector<1x4x8x8xf32> to vector<4x8x8xf32>
    %12 = vector.broadcast %9 : f32 to vector<4x8x8xf32>
    %13 = arith.mulf %12, %11 : vector<4x8x8xf32>
    %14 = arith.addf %8, %13 : vector<4x8x8xf32>
    %c0_18 = arith.constant 0 : index
    %c0_19 = arith.constant 0 : index
    %c0_20 = arith.constant 0 : index
    %15 = vector.load %arg6[%c0_18, %c0_19, %c0_20] : memref<1x1x8xf32, #tpu.memory_space<vmem>>, vector<1x1x8xf32>
    %16 = vector.shape_cast %15 : vector<1x1x8xf32> to vector<1x8xf32>
    %cst_21 = arith.constant 1.000000e+00 : f32
    %17 = vector.broadcast %cst_21 : f32 to vector<1x8xf32>
    %18 = arith.subf %17, %16 : vector<1x8xf32>
    %cst_22 = arith.constant 1.000000e+08 : f32
    %19 = vector.broadcast %cst_22 : f32 to vector<1x8xf32>
    %20 = arith.mulf %19, %18 : vector<1x8xf32>
    %21 = vector.shape_cast %20 : vector<1x8xf32> to vector<1x1x8xf32>
    %22 = vector.broadcast %21 : vector<1x1x8xf32> to vector<4x8x8xf32>
    %23 = arith.subf %14, %22 : vector<4x8x8xf32>
    %c0_23 = arith.constant 0 : index
    %c0_24 = arith.constant 0 : index
    %c0_25 = arith.constant 0 : index
    %c0_26 = arith.constant 0 : index
    %24 = vector.load %arg13[%c0_23, %c0_24, %c0_25, %c0_26] : memref<1x4x8x8xf32, #tpu.memory_space<vmem>>, vector<1x4x8x8xf32>
    %25 = vector.shape_cast %24 : vector<1x4x8x8xf32> to vector<4x8x8xf32>
    %26 = vector.shape_cast %23 : vector<4x8x8xf32> to vector<1x4x8x8xf32>
    tpu.vector_store %arg13[%c0_23, %c0_24, %c0_25, %c0_26], %26 {strides = array<i32>} : memref<1x4x8x8xf32, #tpu.memory_space<vmem>>, vector<1x4x8x8xf32>,
    %cst_27 = arith.constant dense<0xFF800000> : vector<4x8xf32>
    %27 = vector.multi_reduction <maximumf>, %23, %cst_27 [2] : vector<4x8x8xf32> to vector<4x8xf32>
    %28 = vector.shape_cast %27 : vector<4x8xf32> to vector<4x8x1xf32>
    %29 = vector.broadcast %28 : vector<4x8x1xf32> to vector<4x8x8xf32>
    %30 = arith.subf %23, %29 : vector<4x8x8xf32>
    %31 = math.exp %30 : vector<4x8x8xf32>
    %cst_28 = arith.constant dense<0.000000e+00> : vector<4x8xf32>
    %32 = vector.multi_reduction <add>, %31, %cst_28 [2] : vector<4x8x8xf32> to vector<4x8xf32>
    %33 = vector.shape_cast %32 : vector<4x8xf32> to vector<4x8x1xf32>
    %34 = tpu.reciprocal %33 {approx = true} : vector<4x8x1xf32> -> vector<4x8x1xf32>
    %35 = vector.broadcast %34 : vector<4x8x1xf32> to vector<4x8x8xf32>
    %36 = arith.mulf %31, %35 : vector<4x8x8xf32>
    "tpu.trace_start"() <{level = 10 : i32, message = "hqk,hkd->hqd"}> : () -> ()
    %cst_29 = arith.constant dense<0.000000e+00> : vector<4x8x8xf32>
    %37 = tpu.matmul %36, %5, %cst_29 {dimension_numbers = #tpu.dot_dimension_numbers<[2], [1], [1], [2], [0, 0, 0, 1, 1, 2], [0], [0]>} : vector<4x8x8xf32>, vector<4x8x8xf32>, vector<4x8x8xf32> -> vector<4x8x8xf32>
    "tpu.trace_stop"() : () -> ()
    %c0_30 = arith.constant 0 : index
    %c0_31 = arith.constant 0 : index
    %c0_32 = arith.constant 0 : index
    %38 = vector.load %arg8[%c0_30, %c0_31, %c0_32] : memref<4x8x32xf32, #tpu.memory_space<vmem>>, vector<4x8x32xf32>
    "tpu.trace_start"() <{level = 10 : i32, message = "hqd,hde->hqe"}> : () -> ()
    %cst_33 = arith.constant dense<0.000000e+00> : vector<4x8x32xf32>
    %39 = tpu.matmul %1, %38, %cst_33 {dimension_numbers = #tpu.dot_dimension_numbers<[2], [1], [1], [2], [0, 0, 0, 1, 1, 2], [0], [0]>} : vector<4x8x8xf32>, vector<4x8x32xf32>, vector<4x8x32xf32> -> vector<4x8x32xf32>
    "tpu.trace_stop"() : () -> ()
    %c0_34 = arith.constant 0 : index
    %c0_35 = arith.constant 0 : index
    %c0_36 = arith.constant 0 : index
    %40 = vector.load %arg9[%c0_34, %c0_35, %c0_36] : memref<4x8x32xf32, #tpu.memory_space<vmem>>, vector<4x8x32xf32>
    "tpu.trace_start"() <{level = 10 : i32, message = "hqd,hde->hqe"}> : () -> ()
    %cst_37 = arith.constant dense<0.000000e+00> : vector<4x8x32xf32>
    %41 = tpu.matmul %37, %40, %cst_37 {dimension_numbers = #tpu.dot_dimension_numbers<[2], [1], [1], [2], [0, 0, 0, 1, 1, 2], [0], [0]>} : vector<4x8x8xf32>, vector<4x8x32xf32>, vector<4x8x32xf32> -> vector<4x8x32xf32>
    "tpu.trace_stop"() : () -> ()
    %42 = arith.addf %39, %41 : vector<4x8x32xf32>
    %cst_38 = arith.constant dense<0.000000e+00> : vector<8x32xf32>
    %43 = vector.multi_reduction <add>, %42, %cst_38 [0] : vector<4x8x32xf32> to vector<8x32xf32>
    %cst_39 = arith.constant dense<0.000000e+00> : vector<8xf32>
    %44 = vector.multi_reduction <add>, %43, %cst_39 [1] : vector<8x32xf32> to vector<8xf32>
    %45 = vector.shape_cast %44 : vector<8xf32> to vector<8x1xf32>
    %cst_40 = arith.constant 3.200000e+01 : f32
    %46 = vector.broadcast %cst_40 : f32 to vector<8x1xf32>
    %47 = arith.divf %45, %46 : vector<8x1xf32>
    %48 = vector.broadcast %47 : vector<8x1xf32> to vector<8x32xf32>
    %49 = arith.subf %43, %48 : vector<8x32xf32>
    %50 = arith.mulf %49, %49 : vector<8x32xf32>
    %cst_41 = arith.constant dense<0.000000e+00> : vector<8xf32>
    %51 = vector.multi_reduction <add>, %50, %cst_41 [1] : vector<8x32xf32> to vector<8xf32>
    %52 = vector.shape_cast %51 : vector<8xf32> to vector<8x1xf32>
    %cst_42 = arith.constant 3.200000e+01 : f32
    %53 = vector.broadcast %cst_42 : f32 to vector<8x1xf32>
    %54 = arith.divf %52, %53 : vector<8x1xf32>
    %55 = vector.broadcast %47 : vector<8x1xf32> to vector<8x32xf32>
    %56 = arith.subf %43, %55 : vector<8x32xf32>
    %cst_43 = arith.constant 9.99999974E-6 : f32
    %57 = vector.broadcast %cst_43 : f32 to vector<8x1xf32>
    %58 = arith.addf %54, %57 : vector<8x1xf32>
    %59 = math.rsqrt %58 : vector<8x1xf32>
    %60 = vector.broadcast %59 : vector<8x1xf32> to vector<8x32xf32>
    %61 = arith.mulf %56, %60 : vector<8x32xf32>
    %c0_44 = arith.constant 0 : index
    %c0_45 = arith.constant 0 : index
    %62 = vector.load %arg10[%c0_44, %c0_45] : memref<1x32xf32, #tpu.memory_space<vmem>>, vector<1x32xf32>
    %63 = vector.broadcast %62 : vector<1x32xf32> to vector<8x32xf32>
    %64 = arith.mulf %61, %63 : vector<8x32xf32>
    %c0_46 = arith.constant 0 : index
    %c0_47 = arith.constant 0 : index
    %65 = vector.load %arg11[%c0_46, %c0_47] : memref<1x32xf32, #tpu.memory_space<vmem>>, vector<1x32xf32>
    %66 = vector.broadcast %65 : vector<1x32xf32> to vector<8x32xf32>
    %67 = arith.addf %64, %66 : vector<8x32xf32>
    %c0_48 = arith.constant 0 : index
    %c0_49 = arith.constant 0 : index
    %c0_50 = arith.constant 0 : index
    %68 = vector.load %arg12[%c0_48, %c0_49, %c0_50] : memref<1x8x32xf32, #tpu.memory_space<vmem>>, vector<1x8x32xf32>
    %69 = vector.shape_cast %68 : vector<1x8x32xf32> to vector<8x32xf32>
    %70 = vector.shape_cast %67 : vector<8x32xf32> to vector<1x8x32xf32>
    tpu.vector_store %arg12[%c0_48, %c0_49, %c0_50], %70 {strides = array<i32>} : memref<1x8x32xf32, #tpu.memory_space<vmem>>, vector<1x8x32xf32>,
    return
  }
  func.func @transform_0(%arg0: i32, %arg1: i32) -> (i32, i32) {
    %c0_i32 = arith.constant 0 : i32
    %c0_i32_0 = arith.constant 0 : i32
    %c0_i32_1 = arith.constant 0 : i32
    return %c0_i32, %c0_i32_0 : i32, i32
  }
  func.func @transform_1(%arg0: i32, %arg1: i32) -> (i32, i32, i32, i32) {
    %c0_i32 = arith.constant 0 : i32
    %c0_i32_0 = arith.constant 0 : i32
    %c0_i32_1 = arith.constant 0 : i32
    return %arg0, %c0_i32, %arg1, %c0_i32_0 : i32, i32, i32, i32
  }
  func.func @transform_2(%arg0: i32, %arg1: i32) -> (i32, i32, i32, i32) {
    %c0_i32 = arith.constant 0 : i32
    %c0_i32_0 = arith.constant 0 : i32
    %c0_i32_1 = arith.constant 0 : i32
    %c0_i32_2 = arith.constant 0 : i32
    return %arg0, %c0_i32, %c0_i32_0, %c0_i32_1 : i32, i32, i32, i32
  }
  func.func @transform_3(%arg0: i32, %arg1: i32) -> (i32, i32, i32, i32) {
    %c0_i32 = arith.constant 0 : i32
    %c0_i32_0 = arith.constant 0 : i32
    %c0_i32_1 = arith.constant 0 : i32
    %c0_i32_2 = arith.constant 0 : i32
    return %arg0, %c0_i32, %c0_i32_0, %c0_i32_1 : i32, i32, i32, i32
  }
  func.func @transform_4(%arg0: i32, %arg1: i32) -> (i32, i32, i32) {
    %c0_i32 = arith.constant 0 : i32
    %c0_i32_0 = arith.constant 0 : i32
    %c0_i32_1 = arith.constant 0 : i32
    return %arg0, %c0_i32, %c0_i32_0 : i32, i32, i32
  }
  func.func @transform_5(%arg0: i32, %arg1: i32) -> (i32, i32, i32, i32) {
    %c0_i32 = arith.constant 0 : i32
    %c0_i32_0 = arith.constant 0 : i32
    %c0_i32_1 = arith.constant 0 : i32
    return %arg0, %c0_i32, %arg1, %c0_i32_0 : i32, i32, i32, i32
  }
  func.func @transform_6(%arg0: i32, %arg1: i32) -> (i32, i32, i32) {
    %c0_i32 = arith.constant 0 : i32
    %c0_i32_0 = arith.constant 0 : i32
    %c0_i32_1 = arith.constant 0 : i32
    %c0_i32_2 = arith.constant 0 : i32
    return %c0_i32, %c0_i32_0, %c0_i32_1 : i32, i32, i32
  }
  func.func @transform_7(%arg0: i32, %arg1: i32) -> (i32, i32, i32) {
    %c0_i32 = arith.constant 0 : i32
    %c0_i32_0 = arith.constant 0 : i32
    %c0_i32_1 = arith.constant 0 : i32
    %c0_i32_2 = arith.constant 0 : i32
    return %c0_i32, %c0_i32_0, %c0_i32_1 : i32, i32, i32
  }
  func.func @transform_8(%arg0: i32, %arg1: i32) -> (i32, i32) {
    %c0_i32 = arith.constant 0 : i32
    %c0_i32_0 = arith.constant 0 : i32
    %c0_i32_1 = arith.constant 0 : i32
    return %c0_i32, %c0_i32_0 : i32, i32
  }
  func.func @transform_9(%arg0: i32, %arg1: i32) -> (i32, i32) {
    %c0_i32 = arith.constant 0 : i32
    %c0_i32_0 = arith.constant 0 : i32
    %c0_i32_1 = arith.constant 0 : i32
    return %c0_i32, %c0_i32_0 : i32, i32
  }
  func.func @transform_10(%arg0: i32, %arg1: i32) -> (i32, i32, i32) {
    %c0_i32 = arith.constant 0 : i32
    %c0_i32_0 = arith.constant 0 : i32
    return %arg0, %arg1, %c0_i32 : i32, i32, i32
  }
  func.func @transform_11(%arg0: i32, %arg1: i32) -> (i32, i32, i32, i32) {
    %c0_i32 = arith.constant 0 : i32
    %c0_i32_0 = arith.constant 0 : i32
    %c0_i32_1 = arith.constant 0 : i32
    return %arg0, %c0_i32, %arg1, %c0_i32_0 : i32, i32, i32, i32
  }
}

</mosaic_0001>

<llo_original>
// kernel: tpu_custom_call.1
$region0: #{tpu_custom_call.1}
  #allocation0 [shape = 'u32[]', space=smem, size = 0x4, offset = 0x4, fixed_abs, tag = 'smem constant byte address 0x4 - core index']
  #allocation1 [shape = 'u32[144,128]{1,0:T(1,128)}', space=vmem, size = 0x12000, scoped, tag = 'internal scratch']
  #allocation2 [shape = 'f32[1,1]{1,0:T(1,128)S(6)}', space=smem, size = 0x200, scoped, tag = 'scoped memory for tpu_custom_call.1']
  %s0 = inlined_call_operand.<no memory space> [shape: f32[1,1], index: 0, kind: input, shape index: {}]
  %s1 = inlined_call_operand.hbm [shape: f32[2,4,8,8], index: 1, kind: input, shape index: {}]
  %s2 = inlined_call_operand.hbm [shape: f32[2,4,8,8], index: 2, kind: input, shape index: {}]
  %s3 = inlined_call_operand.hbm [shape: f32[2,4,8,8], index: 3, kind: input, shape index: {}]
  %s4 = inlined_call_operand.vmem [shape: f32[2,1,8], index: 4, kind: input, shape index: {}]
  %s5 = inlined_call_operand.hbm [shape: f32[2,4,8,8], index: 5, kind: input, shape index: {}]
  %s6 = inlined_call_operand.hbm [shape: f32[4,8,32], index: 6, kind: input, shape index: {}]
  %s7 = inlined_call_operand.hbm [shape: f32[4,8,32], index: 7, kind: input, shape index: {}]
  %s8 = inlined_call_operand.vmem [shape: f32[1,32], index: 8, kind: input, shape index: {}]
  %s9 = inlined_call_operand.vmem [shape: f32[1,32], index: 9, kind: input, shape index: {}]
  %s10 = inlined_call_operand.hbm [shape: f32[2,8,32], index: 10, kind: output, shape index: {0}]
  %s11 = inlined_call_operand.hbm [shape: f32[2,4,8,8], index: 11, kind: output, shape index: {1}]
  %12 = xla_tuple %s10, %s11
  %s13 = sld [smem:[#allocation0]]
  $region105: #{tpu_custom_call.1} parent=0
    _
  %s15 = ssub.s32 1, %s13
  %s16 = scalar_select 0, %s15, %s13
  %17 = sst [smem:[#allocation2]] %s0
  $region1: #{tpu_custom_call.1} parent=0
    #allocation3 [shape = 'u8[32768]{0}', space=vmem, size = 0x8000, scoped, tag = 'input window, operand 1']
    #allocation4 [shape = 's32[2]{0}', space=sflag, size = 0x8, scoped, tag = 'scoped memory for tpu_custom_call.1']
    #allocation5 [shape = 's32[2]{0}', space=sflag, size = 0x8, scoped, tag = 'scoped memory for tpu_custom_call.1']
    #allocation6 [shape = 'u8[32768]{0}', space=vmem, size = 0x8000, scoped, tag = 'input window, operand 2']
    #allocation7 [shape = 's32[2]{0}', space=sflag, size = 0x8, scoped, tag = 'scoped memory for tpu_custom_call.1']
    #allocation8 [shape = 'u8[32768]{0}', space=vmem, size = 0x8000, scoped, tag = 'input window, operand 3']
    #allocation9 [shape = 'u8[32768]{0}', space=vmem, size = 0x8000, scoped, tag = 'input window, operand 5']
    #allocation10 [shape = 's32[2]{0}', space=sflag, size = 0x8, scoped, tag = 'scoped memory for tpu_custom_call.1']
    #allocation11 [shape = 'u8[16384]{0}', space=vmem, size = 0x4000, scoped, tag = 'input window, operand 6, single buffered']
    #allocation12 [shape = 'u8[16384]{0}', space=vmem, size = 0x4000, scoped, tag = 'input window, operand 7, single buffered']
    #allocation13 [shape = 's32[1]{0}', space=sflag, size = 0x4, scoped, tag = 'scoped memory for tpu_custom_call.1']
    #allocation14 [shape = 'u8[8192]{0}', space=vmem, size = 0x2000, scoped, tag = 'output window, operand 0']
    #allocation15 [shape = 'u8[32768]{0}', space=vmem, size = 0x8000, scoped, tag = 'output window, operand 1']
    #allocation16 [shape = 's32[2]{0}', space=sflag, size = 0x8, scoped, tag = 'scoped memory for tpu_custom_call.1']
    %18 = vsyncpa [#allocation4], 0
    %s19 = scalar_lea.sflag [#allocation4], 1
    %20 = vsyncpa %s19, 0
    %21 = vsyncpa [#allocation7], 0
    %s22 = scalar_lea.sflag [#allocation7], 1
    %23 = vsyncpa %s22, 0
    %24 = vsyncpa [#allocation10], 0
    %s25 = scalar_lea.sflag [#allocation10], 1
    %26 = vsyncpa %s25, 0
    %27 = vsyncpa [#allocation13], 0
    %28 = vsyncpa [#allocation5], 0
    %s29 = scalar_lea.sflag [#allocation5], 1
    %30 = vsyncpa %s29, 0
    %31 = vsyncpa [#allocation16], 0
    %s32 = scalar_lea.sflag [#allocation16], 1
    %33 = vsyncpa %s32, 0
    loop: start=0, step=1, limit=4
    $region2: #{tpu_custom_call.1} parent=1 // loop_pre_header
      _
    $region3: #{tpu_custom_call.1} parent=1 // loop_header
      %s35 = sphi 0, %s39
      %p36 = scmp.ge.s32.totalorder %s35, 4
      %s42 = sphi 0, %s54
      %s43 = sphi 0, %s50
      %s44 = sphi 0, %s42
      %s45 = sphi 0, %s43
      %s46 = sphi 0, %s44
      %s47 = sphi 0, %s45
      %s55 = sphi 0, %s55
      %s57 = sphi 0, %s55
      %s58 = sphi 0, %s57
      %s72 = sphi 0, %s58
      %s80 = sphi 0, %s82
      %s83 = sphi 0, %s80
      %s84 = sphi 0, %s83
      %s100 = sphi 0, %s84
      %s106 = sphi 0, %s108
      %s109 = sphi 0, %s106
      %s110 = sphi 0, %s109
      %s126 = sphi 0, %s110
      %s132 = sphi 0, %s134
      %s135 = sphi 0, %s132
      %s136 = sphi 0, %s135
      %s152 = sphi 0, %s136
      %s158 = sphi 0, %s160
      %s161 = sphi 0, %s158
      %s162 = sphi 0, %s161
      %s178 = sphi 0, %s162
      %s186 = sphi 0, %s188
      %s189 = sphi 0, %s186
      %s190 = sphi 0, %s189
      %s206 = sphi 0, %s190
      %s210 = sphi 0, %s210
      %s212 = sphi 0, %s210
      %s213 = sphi 0, %s212
      %s227 = sphi 0, %s213
      %s231 = sphi 0, %s231
      %s233 = sphi 0, %s231
      %s234 = sphi 0, %s233
      %s248 = sphi 0, %s234
      %s252 = sphi 0, %s252
      %s254 = sphi 0, %s252
      %s255 = sphi 0, %s254
      %s269 = sphi 0, %s255
      %s273 = sphi 0, %s273
      %s275 = sphi 0, %s273
      %s276 = sphi 0, %s275
      %s290 = sphi 0, %s276
      %s298 = sphi 0, %s300
      %s301 = sphi 0, %s298
      %s302 = sphi 0, %s301
      %s318 = sphi 0, %s302
      %s326 = sphi 0, %s328
      %s329 = sphi 0, %s326
      %s330 = sphi 0, %s329
      %s346 = sphi 0, %s330
    $region4: #{tpu_custom_call.1} parent=1 // loop_header_branch
      %38 = sbr.rel (%p36) target = $region8
    $region5: #{tpu_custom_call.1} parent=1 // loop_body
      %s40 = ssub.s32 %s35, 1
      %s41 = ssub.s32 %s35, 2
      %s48 = sadd.s32 1, %s43
      %p49 = scmp.ge.s32.totalorder %s48, 1
      %s50 = scalar_select %p49, 0, %s48
      %s51 = sadd.s32 1, %s42
      %s52 = scalar_select %p49, %s51, %s42
      %p53 = scmp.ge.s32.totalorder %s52, 2
      %s54 = scalar_select %p53, 0, %s52
      %s56 = sadd.s32 %s55, 1
      %p59 = scmp.eq.s32.totalorder %s35, 1
      %p60 = scmp.ne.s32.totalorder %s55, %s57
      %p61 = scmp.eq.s32.totalorder %s35, 0
      %p62 = por %p60, %p61
      %p63 = scmp.ne.s32.totalorder %s55, %s57
      %p64 = scmp.eq.s32.totalorder %s40, 1
      %p65 = por %p63, %p64
      %p66 = scmp.ne.s32.totalorder %s57, %s58
      %p67 = scmp.eq.s32.totalorder %s40, 0
      %p68 = por %p66, %p67
      %p69 = scmp.ne.s32.totalorder %s57, %s58
      %p70 = scmp.eq.s32.totalorder %s41, 1
      %p71 = por %p69, %p70
      %p73 = scmp.ne.s32.totalorder %s58, %s72
      %p74 = scmp.eq.s32.totalorder %s41, 0
      %p75 = por %p73, %p74
      %s76 = ssub.s32 %s42, %s54
      %s77 = ssub.s32 %s43, %s50
      %s78 = sor.u32 %s76, %s77
      %p79 = scmp.eq.s32.totalorder %s78, 0
      %s81 = sadd.s32 %s80, 1
      %s82 = scalar_select %p79, %s80, %s81
      %p85 = pneg %p79
      %p86 = scmp.eq.s32.totalorder %s35, 1
      %p87 = por %p85, %p86
      %p88 = scmp.ne.s32.totalorder %s80, %s83
      %p89 = scmp.eq.s32.totalorder %s35, 0
      %p90 = por %p88, %p89
      %p91 = scmp.ne.s32.totalorder %s80, %s83
      %p92 = scmp.eq.s32.totalorder %s40, 1
      %p93 = por %p91, %p92
      %p94 = scmp.ne.s32.totalorder %s83, %s84
      %p95 = scmp.eq.s32.totalorder %s40, 0
      %p96 = por %p94, %p95
      %p97 = scmp.ne.s32.totalorder %s83, %s84
      %p98 = scmp.eq.s32.totalorder %s41, 1
      %p99 = por %p97, %p98
      %p101 = scmp.ne.s32.totalorder %s84, %s100
      %p102 = scmp.eq.s32.totalorder %s41, 0
      %p103 = por %p101, %p102
      %s104 = ssub.s32 %s42, %s54
      %p105 = scmp.eq.s32.totalorder %s104, 0
      %s107 = sadd.s32 %s106, 1
      %s108 = scalar_select %p105, %s106, %s107
      %p111 = pneg %p105
      %p112 = scmp.eq.s32.totalorder %s35, 1
      %p113 = por %p111, %p112
      %p114 = scmp.ne.s32.totalorder %s106, %s109
      %p115 = scmp.eq.s32.totalorder %s35, 0
      %p116 = por %p114, %p115
      %p117 = scmp.ne.s32.totalorder %s106, %s109
      %p118 = scmp.eq.s32.totalorder %s40, 1
      %p119 = por %p117, %p118
      %p120 = scmp.ne.s32.totalorder %s109, %s110
      %p121 = scmp.eq.s32.totalorder %s40, 0
      %p122 = por %p120, %p121
      %p123 = scmp.ne.s32.totalorder %s109, %s110
      %p124 = scmp.eq.s32.totalorder %s41, 1
      %p125 = por %p123, %p124
      %p127 = scmp.ne.s32.totalorder %s110, %s126
      %p128 = scmp.eq.s32.totalorder %s41, 0
      %p129 = por %p127, %p128
      %s130 = ssub.s32 %s42, %s54
      %p131 = scmp.eq.s32.totalorder %s130, 0
      %s133 = sadd.s32 %s132, 1
      %s134 = scalar_select %p131, %s132, %s133
      %p137 = pneg %p131
      %p138 = scmp.eq.s32.totalorder %s35, 1
      %p139 = por %p137, %p138
      %p140 = scmp.ne.s32.totalorder %s132, %s135
      %p141 = scmp.eq.s32.totalorder %s35, 0
      %p142 = por %p140, %p141
      %p143 = scmp.ne.s32.totalorder %s132, %s135
      %p144 = scmp.eq.s32.totalorder %s40, 1
      %p145 = por %p143, %p144
      %p146 = scmp.ne.s32.totalorder %s135, %s136
      %p147 = scmp.eq.s32.totalorder %s40, 0
      %p148 = por %p146, %p147
      %p149 = scmp.ne.s32.totalorder %s135, %s136
      %p150 = scmp.eq.s32.totalorder %s41, 1
      %p151 = por %p149, %p150
      %p153 = scmp.ne.s32.totalorder %s136, %s152
      %p154 = scmp.eq.s32.totalorder %s41, 0
      %p155 = por %p153, %p154
      %s156 = ssub.s32 %s42, %s54
      %p157 = scmp.eq.s32.totalorder %s156, 0
      %s159 = sadd.s32 %s158, 1
      %s160 = scalar_select %p157, %s158, %s159
      %p163 = pneg %p157
      %p164 = scmp.eq.s32.totalorder %s35, 1
      %p165 = por %p163, %p164
      %p166 = scmp.ne.s32.totalorder %s158, %s161
      %p167 = scmp.eq.s32.totalorder %s35, 0
      %p168 = por %p166, %p167
      %p169 = scmp.ne.s32.totalorder %s158, %s161
      %p170 = scmp.eq.s32.totalorder %s40, 1
      %p171 = por %p169, %p170
      %p172 = scmp.ne.s32.totalorder %s161, %s162
      %p173 = scmp.eq.s32.totalorder %s40, 0
      %p174 = por %p172, %p173
      %p175 = scmp.ne.s32.totalorder %s161, %s162
      %p176 = scmp.eq.s32.totalorder %s41, 1
      %p177 = por %p175, %p176
      %p179 = scmp.ne.s32.totalorder %s162, %s178
      %p180 = scmp.eq.s32.totalorder %s41, 0
      %p181 = por %p179, %p180
      %s182 = ssub.s32 %s42, %s54
      %s183 = ssub.s32 %s43, %s50
      %s184 = sor.u32 %s182, %s183
      %p185 = scmp.eq.s32.totalorder %s184, 0
      %s187 = sadd.s32 %s186, 1
      %s188 = scalar_select %p185, %s186, %s187
      %p191 = pneg %p185
      %p192 = scmp.eq.s32.totalorder %s35, 1
      %p193 = por %p191, %p192
      %p194 = scmp.ne.s32.totalorder %s186, %s189
      %p195 = scmp.eq.s32.totalorder %s35, 0
      %p196 = por %p194, %p195
      %p197 = scmp.ne.s32.totalorder %s186, %s189
      %p198 = scmp.eq.s32.totalorder %s40, 1
      %p199 = por %p197, %p198
      %p200 = scmp.ne.s32.totalorder %s189, %s190
      %p201 = scmp.eq.s32.totalorder %s40, 0
      %p202 = por %p200, %p201
      %p203 = scmp.ne.s32.totalorder %s189, %s190
      %p204 = scmp.eq.s32.totalorder %s41, 1
      %p205 = por %p203, %p204
      %p207 = scmp.ne.s32.totalorder %s190, %s206
      %p208 = scmp.eq.s32.totalorder %s41, 0
      %p209 = por %p207, %p208
      %s211 = sadd.s32 %s210, 1
      %p214 = scmp.eq.s32.totalorder %s35, 1
      %p215 = scmp.ne.s32.totalorder %s210, %s212
      %p216 = scmp.eq.s32.totalorder %s35, 0
      %p217 = por %p215, %p216
      %p218 = scmp.ne.s32.totalorder %s210, %s212
      %p219 = scmp.eq.s32.totalorder %s40, 1
      %p220 = por %p218, %p219
      %p221 = scmp.ne.s32.totalorder %s212, %s213
      %p222 = scmp.eq.s32.totalorder %s40, 0
      %p223 = por %p221, %p222
      %p224 = scmp.ne.s32.totalorder %s212, %s213
      %p225 = scmp.eq.s32.totalorder %s41, 1
      %p226 = por %p224, %p225
      %p228 = scmp.ne.s32.totalorder %s213, %s227
      %p229 = scmp.eq.s32.totalorder %s41, 0
      %p230 = por %p228, %p229
      %s232 = sadd.s32 %s231, 1
      %p235 = scmp.eq.s32.totalorder %s35, 1
      %p236 = scmp.ne.s32.totalorder %s231, %s233
      %p237 = scmp.eq.s32.totalorder %s35, 0
      %p238 = por %p236, %p237
      %p239 = scmp.ne.s32.totalorder %s231, %s233
      %p240 = scmp.eq.s32.totalorder %s40, 1
      %p241 = por %p239, %p240
      %p242 = scmp.ne.s32.totalorder %s233, %s234
      %p243 = scmp.eq.s32.totalorder %s40, 0
      %p244 = por %p242, %p243
      %p245 = scmp.ne.s32.totalorder %s233, %s234
      %p246 = scmp.eq.s32.totalorder %s41, 1
      %p247 = por %p245, %p246
      %p249 = scmp.ne.s32.totalorder %s234, %s248
      %p250 = scmp.eq.s32.totalorder %s41, 0
      %p251 = por %p249, %p250
      %s253 = sadd.s32 %s252, 1
      %p256 = scmp.eq.s32.totalorder %s35, 1
      %p257 = scmp.ne.s32.totalorder %s252, %s254
      %p258 = scmp.eq.s32.totalorder %s35, 0
      %p259 = por %p257, %p258
      %p260 = scmp.ne.s32.totalorder %s252, %s254
      %p261 = scmp.eq.s32.totalorder %s40, 1
      %p262 = por %p260, %p261
      %p263 = scmp.ne.s32.totalorder %s254, %s255
      %p264 = scmp.eq.s32.totalorder %s40, 0
      %p265 = por %p263, %p264
      %p266 = scmp.ne.s32.totalorder %s254, %s255
      %p267 = scmp.eq.s32.totalorder %s41, 1
      %p268 = por %p266, %p267
      %p270 = scmp.ne.s32.totalorder %s255, %s269
      %p271 = scmp.eq.s32.totalorder %s41, 0
      %p272 = por %p270, %p271
      %s274 = sadd.s32 %s273, 1
      %p277 = scmp.eq.s32.totalorder %s35, 1
      %p278 = scmp.ne.s32.totalorder %s273, %s275
      %p279 = scmp.eq.s32.totalorder %s35, 0
      %p280 = por %p278, %p279
      %p281 = scmp.ne.s32.totalorder %s273, %s275
      %p282 = scmp.eq.s32.totalorder %s40, 1
      %p283 = por %p281, %p282
      %p284 = scmp.ne.s32.totalorder %s275, %s276
      %p285 = scmp.eq.s32.totalorder %s40, 0
      %p286 = por %p284, %p285
      %p287 = scmp.ne.s32.totalorder %s275, %s276
      %p288 = scmp.eq.s32.totalorder %s41, 1
      %p289 = por %p287, %p288
      %p291 = scmp.ne.s32.totalorder %s276, %s290
      %p292 = scmp.eq.s32.totalorder %s41, 0
      %p293 = por %p291, %p292
      %s294 = ssub.s32 %s42, %s54
      %s295 = ssub.s32 %s43, %s50
      %s296 = sor.u32 %s294, %s295
      %p297 = scmp.eq.s32.totalorder %s296, 0
      %s299 = sadd.s32 %s298, 1
      %s300 = scalar_select %p297, %s298, %s299
      %p303 = pneg %p297
      %p304 = scmp.eq.s32.totalorder %s35, 1
      %p305 = por %p303, %p304
      %p306 = scmp.ne.s32.totalorder %s298, %s301
      %p307 = scmp.eq.s32.totalorder %s35, 0
      %p308 = por %p306, %p307
      %p309 = scmp.ne.s32.totalorder %s298, %s301
      %p310 = scmp.eq.s32.totalorder %s40, 1
      %p311 = por %p309, %p310
      %p312 = scmp.ne.s32.totalorder %s301, %s302
      %p313 = scmp.eq.s32.totalorder %s40, 0
      %p314 = por %p312, %p313
      %p315 = scmp.ne.s32.totalorder %s301, %s302
      %p316 = scmp.eq.s32.totalorder %s41, 1
      %p317 = por %p315, %p316
      %p319 = scmp.ne.s32.totalorder %s302, %s318
      %p320 = scmp.eq.s32.totalorder %s41, 0
      %p321 = por %p319, %p320
      %s322 = ssub.s32 %s42, %s54
      %s323 = ssub.s32 %s43, %s50
      %s324 = sor.u32 %s322, %s323
      %p325 = scmp.eq.s32.totalorder %s324, 0
      %s327 = sadd.s32 %s326, 1
      %s328 = scalar_select %p325, %s326, %s327
      %p331 = pneg %p325
      %p332 = scmp.eq.s32.totalorder %s35, 1
      %p333 = por %p331, %p332
      %p334 = scmp.ne.s32.totalorder %s326, %s329
      %p335 = scmp.eq.s32.totalorder %s35, 0
      %p336 = por %p334, %p335
      %p337 = scmp.ne.s32.totalorder %s326, %s329
      %p338 = scmp.eq.s32.totalorder %s40, 1
      %p339 = por %p337, %p338
      %p340 = scmp.ne.s32.totalorder %s329, %s330
      %p341 = scmp.eq.s32.totalorder %s40, 0
      %p342 = por %p340, %p341
      %p343 = scmp.ne.s32.totalorder %s329, %s330
      %p344 = scmp.eq.s32.totalorder %s41, 1
      %p345 = por %p343, %p344
      %p347 = scmp.ne.s32.totalorder %s330, %s346
      %p348 = scmp.eq.s32.totalorder %s41, 0
      %p349 = por %p347, %p348
      %p350 = scmp.le.s32.totalorder 1, %s35
      %p351 = scmp.lt.s32.totalorder %s35, 3
      %p352 = pnand %p350, %p351
      %p353 = pneg %p352
      // Predicated region
      $region9: #{tpu_custom_call.1} parent=5 // pred_check
        _
      $region10: #{tpu_custom_call.1} parent=5 // pred_check_branch
        %355 = sbr.rel (%p352) target = $region12
      $region11: #{tpu_custom_call.1} parent=5 // pred_region
        %s356 = ssub.s32 %s35, 1
        // Predicated region
        $region13: #{tpu_custom_call.1} parent=11 // pred_check
          %p357 = pneg %p68
        $region14: #{tpu_custom_call.1} parent=11 // pred_check_branch
          %359 = sbr.rel (%p357) target = $region16
        $region15: #{tpu_custom_call.1} parent=11 // pred_region
          _
        $region16: #{tpu_custom_call.1} parent=11 // pred_fallthru
          _
        // Predicated region
        $region17: #{tpu_custom_call.1} parent=11 // pred_check
          %p360 = pneg %p223
        $region18: #{tpu_custom_call.1} parent=11 // pred_check_branch
          %362 = sbr.rel (%p360) target = $region20
        $region19: #{tpu_custom_call.1} parent=11 // pred_region
          %s364 = ssub.s32 512, 512
          %365 = vsyncadd [#allocation10], %s364
          %s366 = sshll.u32 [#allocation11], 4
          %s367 = int_to_ptr.vmem [resolvable:$true] %s366
          %372 = dma.hbm_to_vmem [thread:$0]  %s6, 512, %s367, [#allocation10], 128, 128, 8
        $region20: #{tpu_custom_call.1} parent=11 // pred_fallthru
          _
        // Predicated region
        $region21: #{tpu_custom_call.1} parent=11 // pred_check
          %p373 = pneg %p244
        $region22: #{tpu_custom_call.1} parent=11 // pred_check_branch
          %375 = sbr.rel (%p373) target = $region24
        $region23: #{tpu_custom_call.1} parent=11 // pred_region
          %s377 = ssub.s32 512, 512
          %378 = vsyncadd [#allocation13], %s377
          %s379 = sshll.u32 [#allocation12], 4
          %s380 = int_to_ptr.vmem [resolvable:$true] %s379
          %385 = dma.hbm_to_vmem [thread:$0]  %s7, 512, %s380, [#allocation13], 128, 128, 8
        $region24: #{tpu_custom_call.1} parent=11 // pred_fallthru
          _
        // Predicated region
        $region25: #{tpu_custom_call.1} parent=11 // pred_check
          %p386 = pneg %p265
        $region26: #{tpu_custom_call.1} parent=11 // pred_check_branch
          %388 = sbr.rel (%p386) target = $region28
        $region27: #{tpu_custom_call.1} parent=11 // pred_region
          _
        $region28: #{tpu_custom_call.1} parent=11 // pred_fallthru
          _
        // Predicated region
        $region29: #{tpu_custom_call.1} parent=11 // pred_check
          %p389 = pneg %p286
        $region30: #{tpu_custom_call.1} parent=11 // pred_check_branch
          %391 = sbr.rel (%p389) target = $region32
        $region31: #{tpu_custom_call.1} parent=11 // pred_region
          _
        $region32: #{tpu_custom_call.1} parent=11 // pred_fallthru
          _
      $region12: #{tpu_custom_call.1} parent=5 // pred_fallthru
        _
      %p392 = scmp.lt.s32.totalorder %s35, 2
      // Predicated region
      $region33: #{tpu_custom_call.1} parent=5 // pred_check
        %p393 = pneg %p392
      $region34: #{tpu_custom_call.1} parent=5 // pred_check_branch
        %395 = sbr.rel (%p393) target = $region36
      $region35: #{tpu_custom_call.1} parent=5 // pred_region
        // Predicated region
        $region37: #{tpu_custom_call.1} parent=35 // pred_check
          %p396 = pneg %p90
        $region38: #{tpu_custom_call.1} parent=35 // pred_check_branch
          %398 = sbr.rel (%p396) target = $region40
        $region39: #{tpu_custom_call.1} parent=35 // pred_region
          %s399 = sand.u32 %s80, 1
          %s400 = scalar_lea.sflag [#allocation4], %s399
          %s401 = sand.u32 %s80, 1
          %s402 = smul.addr %s401, 32
          %s403 = scalar_lea.vmem [#allocation3], %s402
          %s405 = ssub.s32 512, 512
          %406 = vsyncadd %s400, %s405
          %s407 = smul.addr %s42, 4
          %s408 = sadd.s32 %s43, %s407
          %s409 = smul.addr %s408, 128
          %s410 = scalar_lea.hbm %s1, %s409
          %s411 = sshll.u32 %s403, 4
          %s412 = int_to_ptr.vmem [resolvable:$true] %s411
          %417 = dma.hbm_to_vmem [thread:$0]  %s410, 512, %s412, %s400, 128, 128, 8
        $region40: #{tpu_custom_call.1} parent=35 // pred_fallthru
          _
        // Predicated region
        $region41: #{tpu_custom_call.1} parent=35 // pred_check
          %p418 = pneg %p116
        $region42: #{tpu_custom_call.1} parent=35 // pred_check_branch
          %420 = sbr.rel (%p418) target = $region44
        $region43: #{tpu_custom_call.1} parent=35 // pred_region
          %s421 = sand.u32 %s35, 1
          %s422 = scalar_lea.sflag [#allocation7], %s421
          %s423 = sand.u32 %s106, 1
          %s424 = smul.addr %s423, 32
          %s425 = scalar_lea.vmem [#allocation6], %s424
          %s427 = ssub.s32 512, 512
          %428 = vsyncadd %s422, %s427
          %s429 = smul.addr %s42, 4
          %s430 = smul.addr %s429, 128
          %s431 = scalar_lea.hbm %s2, %s430
          %s432 = sshll.u32 %s425, 4
          %s433 = int_to_ptr.vmem [resolvable:$true] %s432
          %438 = dma.hbm_to_vmem [thread:$0]  %s431, 512, %s433, %s422, 128, 128, 8
        $region44: #{tpu_custom_call.1} parent=35 // pred_fallthru
          _
        // Predicated region
        $region45: #{tpu_custom_call.1} parent=35 // pred_check
          %p439 = pneg %p142
        $region46: #{tpu_custom_call.1} parent=35 // pred_check_branch
          %441 = sbr.rel (%p439) target = $region48
        $region47: #{tpu_custom_call.1} parent=35 // pred_region
          %s442 = sand.u32 %s35, 1
          %s443 = scalar_lea.sflag [#allocation7], %s442
          %s444 = sand.u32 %s132, 1
          %s445 = smul.addr %s444, 32
          %s446 = scalar_lea.vmem [#allocation8], %s445
          %s448 = ssub.s32 512, 512
          %449 = vsyncadd %s443, %s448
          %s450 = smul.addr %s42, 4
          %s451 = smul.addr %s450, 128
          %s452 = scalar_lea.hbm %s3, %s451
          %s453 = sshll.u32 %s446, 4
          %s454 = int_to_ptr.vmem [resolvable:$true] %s453
          %459 = dma.hbm_to_vmem [thread:$0]  %s452, 512, %s454, %s443, 128, 128, 8
        $region48: #{tpu_custom_call.1} parent=35 // pred_fallthru
          _
        // Predicated region
        $region49: #{tpu_custom_call.1} parent=35 // pred_check
          %p460 = pneg %p168
        $region50: #{tpu_custom_call.1} parent=35 // pred_check_branch
          %462 = sbr.rel (%p460) target = $region52
        $region51: #{tpu_custom_call.1} parent=35 // pred_region
          %p463 = scmp.lt.s32.totalorder %s42, 1
          %s464 = scalar_select %p463, %s42, 1
          %s465 = scalar_lea.vmem %s4, %s464
        $region52: #{tpu_custom_call.1} parent=35 // pred_fallthru
          _
        // Predicated region
        $region53: #{tpu_custom_call.1} parent=35 // pred_check
          %p466 = pneg %p196
        $region54: #{tpu_custom_call.1} parent=35 // pred_check_branch
          %468 = sbr.rel (%p466) target = $region56
        $region55: #{tpu_custom_call.1} parent=35 // pred_region
          %s469 = sand.u32 %s35, 1
          %s470 = scalar_lea.sflag [#allocation10], %s469
          %s471 = sand.u32 %s186, 1
          %s472 = smul.addr %s471, 32
          %s473 = scalar_lea.vmem [#allocation9], %s472
          %s475 = ssub.s32 512, 512
          %476 = vsyncadd %s470, %s475
          %s477 = smul.addr %s42, 4
          %s478 = sadd.s32 %s43, %s477
          %s479 = smul.addr %s478, 128
          %s480 = scalar_lea.hbm %s5, %s479
          %s481 = sshll.u32 %s473, 4
          %s482 = int_to_ptr.vmem [resolvable:$true] %s481
          %487 = dma.hbm_to_vmem [thread:$0]  %s480, 512, %s482, %s470, 128, 128, 8
        $region56: #{tpu_custom_call.1} parent=35 // pred_fallthru
          _
      $region36: #{tpu_custom_call.1} parent=5 // pred_fallthru
        _
      %p488 = scmp.le.s32.totalorder 1, %s35
      %p489 = scmp.lt.s32.totalorder %s35, 3
      %p490 = pnand %p488, %p489
      %p491 = pneg %p490
      // Predicated region
      $region57: #{tpu_custom_call.1} parent=5 // pred_check
        _
      $region58: #{tpu_custom_call.1} parent=5 // pred_check_branch
        %493 = sbr.rel (%p490) target = $region60
      $region59: #{tpu_custom_call.1} parent=5 // pred_region
        %s494 = ssub.s32 %s35, 1
        %s495 = sand.u32 %s83, 1
        %s496 = scalar_lea.sflag [#allocation4], %s495
        %s497 = sand.u32 %s83, 1
        %s498 = smul.addr %s497, 32
        %s499 = scalar_lea.vmem [#allocation3], %s498
        // Predicated region
        $region61: #{tpu_custom_call.1} parent=59 // pred_check
          %p500 = pneg %p96
        $region62: #{tpu_custom_call.1} parent=59 // pred_check_branch
          %502 = sbr.rel (%p500) target = $region64
        $region63: #{tpu_custom_call.1} parent=59 // pred_region
          %503 = dma.done %s496, 512
        $region64: #{tpu_custom_call.1} parent=59 // pred_fallthru
          _
        %s504 = sand.u32 %s40, 1
        %s505 = scalar_lea.sflag [#allocation7], %s504
        %s506 = sand.u32 %s109, 1
        %s507 = smul.addr %s506, 32
        %s508 = scalar_lea.vmem [#allocation6], %s507
        // Predicated region
        $region65: #{tpu_custom_call.1} parent=59 // pred_check
          %p509 = pneg %p122
        $region66: #{tpu_custom_call.1} parent=59 // pred_check_branch
          %511 = sbr.rel (%p509) target = $region68
        $region67: #{tpu_custom_call.1} parent=59 // pred_region
          %512 = dma.done %s505, 512
        $region68: #{tpu_custom_call.1} parent=59 // pred_fallthru
          _
        %s513 = sand.u32 %s40, 1
        %s514 = scalar_lea.sflag [#allocation7], %s513
        %s515 = sand.u32 %s135, 1
        %s516 = smul.addr %s515, 32
        %s517 = scalar_lea.vmem [#allocation8], %s516
        // Predicated region
        $region69: #{tpu_custom_call.1} parent=59 // pred_check
          %p518 = pneg %p148
        $region70: #{tpu_custom_call.1} parent=59 // pred_check_branch
          %520 = sbr.rel (%p518) target = $region72
        $region71: #{tpu_custom_call.1} parent=59 // pred_region
          %521 = dma.done %s514, 512
        $region72: #{tpu_custom_call.1} parent=59 // pred_fallthru
          _
        %s522 = sand.u32 %s40, 1
        %s523 = scalar_lea.sflag [#allocation10], %s522
        %s524 = sand.u32 %s189, 1
        %s525 = smul.addr %s524, 32
        %s526 = scalar_lea.vmem [#allocation9], %s525
        // Predicated region
        $region73: #{tpu_custom_call.1} parent=59 // pred_check
          %p527 = pneg %p202
        $region74: #{tpu_custom_call.1} parent=59 // pred_check_branch
          %529 = sbr.rel (%p527) target = $region76
        $region75: #{tpu_custom_call.1} parent=59 // pred_region
          %530 = dma.done %s523, 512
        $region76: #{tpu_custom_call.1} parent=59 // pred_fallthru
          _
        // Predicated region
        $region77: #{tpu_custom_call.1} parent=59 // pred_check
          %p531 = pneg %p223
        $region78: #{tpu_custom_call.1} parent=59 // pred_check_branch
          %533 = sbr.rel (%p531) target = $region80
        $region79: #{tpu_custom_call.1} parent=59 // pred_region
          %534 = dma.done [#allocation10], 512
        $region80: #{tpu_custom_call.1} parent=59 // pred_fallthru
          _
        // Predicated region
        $region81: #{tpu_custom_call.1} parent=59 // pred_check
          %p535 = pneg %p244
        $region82: #{tpu_custom_call.1} parent=59 // pred_check_branch
          %537 = sbr.rel (%p535) target = $region84
        $region83: #{tpu_custom_call.1} parent=59 // pred_region
          %538 = dma.done [#allocation13], 512
        $region84: #{tpu_custom_call.1} parent=59 // pred_fallthru
          _
        %p539 = pneg %p68
        %p540 = pneg %p65
        %s541 = sand.u32 %s83, 1
        %s542 = scalar_lea.sflag [#allocation4], %s541
        %s543 = sand.u32 %s83, 1
        %s544 = smul.addr %s543, 32
        %s545 = scalar_lea.vmem [#allocation3], %s544
        %p546 = pneg %p96
        %p547 = pneg %p93
        %s548 = sand.u32 %s40, 1
        %s549 = scalar_lea.sflag [#allocation7], %s548
        %s550 = sand.u32 %s109, 1
        %s551 = smul.addr %s550, 32
        %s552 = scalar_lea.vmem [#allocation6], %s551
        %p553 = pneg %p122
        %p554 = pneg %p119
        %s555 = sand.u32 %s40, 1
        %s556 = scalar_lea.sflag [#allocation7], %s555
        %s557 = sand.u32 %s135, 1
        %s558 = smul.addr %s557, 32
        %s559 = scalar_lea.vmem [#allocation8], %s558
        %p560 = pneg %p148
        %p561 = pneg %p145
        %p562 = scmp.lt.s32.totalorder %s44, 1
        %s563 = scalar_select %p562, %s44, 1
        %s564 = scalar_lea.vmem %s4, %s563
        %p565 = pneg %p174
        %p566 = pneg %p171
        %s567 = sand.u32 %s40, 1
        %s568 = scalar_lea.sflag [#allocation10], %s567
        %s569 = sand.u32 %s189, 1
        %s570 = smul.addr %s569, 32
        %s571 = scalar_lea.vmem [#allocation9], %s570
        %p572 = pneg %p202
        %p573 = pneg %p199
        %p574 = pneg %p223
        %p575 = pneg %p220
        %p576 = pneg %p244
        %p577 = pneg %p241
        %p578 = pneg %p265
        %p579 = pneg %p262
        %p580 = pneg %p286
        %p581 = pneg %p283
        %p582 = pneg %p314
        %p583 = pneg %p311
        %s584 = sand.u32 %s301, 1
        %s585 = scalar_lea.sflag [#allocation5], %s584
        %s586 = sand.u32 %s301, 1
        %s587 = smul.addr %s586, 8
        %s588 = scalar_lea.vmem [#allocation14], %s587
        %p589 = pneg %p342
        %p590 = pneg %p339
        %s591 = sand.u32 %s329, 1
        %s592 = scalar_lea.sflag [#allocation16], %s591
        %s593 = sand.u32 %s329, 1
        %s594 = smul.addr %s593, 32
        %s595 = scalar_lea.vmem [#allocation15], %s594
        %p596 = scmp.lt.s32.totalorder %s44, 1
        %s597 = scalar_select %p596, %s44, 1
        %s598 = scalar_lea.vmem %s4, %s597
        %v599 = vld [vmem:[%s499] sm:$0xff]
        %v600 = vld [vmem:[%s499 + $0x8] sm:$0xff]
        %v601 = vld [vmem:[%s499 + $0x10] sm:$0xff]
        %v602 = vld [vmem:[%s499 + $0x18] sm:$0xff]
        %v603 = vld [vmem:[%s508] sm:$0xff]
        %v604 = vld [vmem:[%s508 + $0x8] sm:$0xff]
        %v605 = vld [vmem:[%s508 + $0x10] sm:$0xff]
        %v606 = vld [vmem:[%s508 + $0x18] sm:$0xff]
        %v607 = vld [vmem:[%s517] sm:$0xff]
        %v608 = vld [vmem:[%s517 + $0x8] sm:$0xff]
        %v609 = vld [vmem:[%s517 + $0x10] sm:$0xff]
        %v610 = vld [vmem:[%s517 + $0x18] sm:$0xff]
        %vm611 = vcmask 64512
        %v613 = vsel %vm611, %v599, 0
        %v616 = vsel %vm611, %v603, 0
        %618 = vmatprep.subr.mxu0 0.0
        %619 = vmatpush1.xpose.msra.mxu0 0.0
        %620 = vmatprep.subr.mxu0 0.0
        %621 = vmatpush1.xpose.msra.mxu0 0.0
        %622 = vmatprep.subr.mxu0 0.0
        %623 = vmatpush1.xpose.msra.mxu0 0.0
        %624 = vmatprep.subr.mxu0 0.0
        %625 = vmatpush1.xpose.msra.mxu0 0.0
        %626 = vmatprep.subr.mxu0 0.0
        %627 = vmatpush1.xpose.msra.mxu0 0.0
        %628 = vmatprep.subr.mxu0 0.0
        %629 = vmatpush1.xpose.msra.mxu0 0.0
        %630 = vmatprep.subr.mxu0 0.0
        %631 = vmatpush1.xpose.msra.mxu0 0.0
        %632 = vmatprep.subr.mxu0 0.0
        %633 = vmatpush1.xpose.msra.mxu0 0.0
        %634 = vmatprep.subr.mxu0 0.0
        %635 = vmatpush1.xpose.msra.mxu0 0.0
        %636 = vmatprep.subr.mxu0 0.0
        %637 = vmatpush1.xpose.msra.mxu0 0.0
        %638 = vmatprep.subr.mxu0 0.0
        %639 = vmatpush1.xpose.msra.mxu0 0.0
        %640 = vmatprep.subr.mxu0 0.0
        %641 = vmatpush1.xpose.msra.mxu0 0.0
        %642 = vmatprep.subr.mxu0 0.0
        %643 = vmatpush1.xpose.msra.mxu0 0.0
        %644 = vmatprep.subr.mxu0 0.0
        %645 = vmatpush1.xpose.msra.mxu0 0.0
        %646 = vmatprep.subr.mxu0 0.0
        %647 = vmatpush1.xpose.msra.mxu0 0.0
        %648 = vmatprep.subr.mxu0 0.0
        %649 = vmatpush1.xpose.msra.mxu0 %v616
        %650 = vmatprep.subr.mxu0 0.0
        %651 = vmatpush2.xpose.msra.mxu0 0.0
        %652 = vmatprep.subr.mxu0 0.0
        %653 = vmatpush2.xpose.msra.mxu0 0.0
        %654 = vmatprep.subr.mxu0 0.0
        %655 = vmatpush2.xpose.msra.mxu0 0.0
        %656 = vmatprep.subr.mxu0 0.0
        %657 = vmatpush2.xpose.msra.mxu0 0.0
        %658 = vmatprep.subr.mxu0 0.0
        %659 = vmatpush2.xpose.msra.mxu0 0.0
        %660 = vmatprep.subr.mxu0 0.0
        %661 = vmatpush2.xpose.msra.mxu0 0.0
        %662 = vmatprep.subr.mxu0 0.0
        %663 = vmatpush2.xpose.msra.mxu0 0.0
        %664 = vmatprep.subr.mxu0 0.0
        %665 = vmatpush2.xpose.msra.mxu0 0.0
        %666 = vmatprep.subr.mxu0 0.0
        %667 = vmatpush2.xpose.msra.mxu0 0.0
        %668 = vmatprep.subr.mxu0 0.0
        %669 = vmatpush2.xpose.msra.mxu0 0.0
        %670 = vmatprep.subr.mxu0 0.0
        %671 = vmatpush2.xpose.msra.mxu0 0.0
        %672 = vmatprep.subr.mxu0 0.0
        %673 = vmatpush2.xpose.msra.mxu0 0.0
        %674 = vmatprep.subr.mxu0 0.0
        %675 = vmatpush2.xpose.msra.mxu0 0.0
        %676 = vmatprep.subr.mxu0 0.0
        %677 = vmatpush2.xpose.msra.mxu0 0.0
        %678 = vmatprep.subr.mxu0 0.0
        %679 = vmatpush2.xpose.msra.mxu0 0.0
        %680 = vmatprep.subr.mxu0 0.0
        %681 = vmatpush2.xpose.msra.mxu0 0.0
        %682 = vmatprep.mubr.f32.mxu0 0.0
        %683 = vmatmul.mubr.f32.gmra.mxu0 %v613
        %v684 = vpop.f32.mrf.mxu0
        %v685 = vadd.f32 0.0, %v684
        %v686 = vpop.f32.mrf.mxu0
        %687 = vdwg.mxu0
        %v689 = vsel %vm611, %v600, 0
        %v692 = vsel %vm611, %v604, 0
        %694 = vmatprep.subr.mxu0 0.0
        %695 = vmatpush1.xpose.msra.mxu0 0.0
        %696 = vmatprep.subr.mxu0 0.0
        %697 = vmatpush1.xpose.msra.mxu0 0.0
        %698 = vmatprep.subr.mxu0 0.0
        %699 = vmatpush1.xpose.msra.mxu0 0.0
        %700 = vmatprep.subr.mxu0 0.0
        %701 = vmatpush1.xpose.msra.mxu0 0.0
        %702 = vmatprep.subr.mxu0 0.0
        %703 = vmatpush1.xpose.msra.mxu0 0.0
        %704 = vmatprep.subr.mxu0 0.0
        %705 = vmatpush1.xpose.msra.mxu0 0.0
        %706 = vmatprep.subr.mxu0 0.0
        %707 = vmatpush1.xpose.msra.mxu0 0.0
        %708 = vmatprep.subr.mxu0 0.0
        %709 = vmatpush1.xpose.msra.mxu0 0.0
        %710 = vmatprep.subr.mxu0 0.0
        %711 = vmatpush1.xpose.msra.mxu0 0.0
        %712 = vmatprep.subr.mxu0 0.0
        %713 = vmatpush1.xpose.msra.mxu0 0.0
        %714 = vmatprep.subr.mxu0 0.0
        %715 = vmatpush1.xpose.msra.mxu0 0.0
        %716 = vmatprep.subr.mxu0 0.0
        %717 = vmatpush1.xpose.msra.mxu0 0.0
        %718 = vmatprep.subr.mxu0 0.0
        %719 = vmatpush1.xpose.msra.mxu0 0.0
        %720 = vmatprep.subr.mxu0 0.0
        %721 = vmatpush1.xpose.msra.mxu0 0.0
        %722 = vmatprep.subr.mxu0 0.0
        %723 = vmatpush1.xpose.msra.mxu0 0.0
        %724 = vmatprep.subr.mxu0 0.0
        %725 = vmatpush1.xpose.msra.mxu0 %v692
        %726 = vmatprep.subr.mxu0 0.0
        %727 = vmatpush2.xpose.msra.mxu0 0.0
        %728 = vmatprep.subr.mxu0 0.0
        %729 = vmatpush2.xpose.msra.mxu0 0.0
        %730 = vmatprep.subr.mxu0 0.0
        %731 = vmatpush2.xpose.msra.mxu0 0.0
        %732 = vmatprep.subr.mxu0 0.0
        %733 = vmatpush2.xpose.msra.mxu0 0.0
        %734 = vmatprep.subr.mxu0 0.0
        %735 = vmatpush2.xpose.msra.mxu0 0.0
        %736 = vmatprep.subr.mxu0 0.0
        %737 = vmatpush2.xpose.msra.mxu0 0.0
        %738 = vmatprep.subr.mxu0 0.0
        %739 = vmatpush2.xpose.msra.mxu0 0.0
        %740 = vmatprep.subr.mxu0 0.0
        %741 = vmatpush2.xpose.msra.mxu0 0.0
        %742 = vmatprep.subr.mxu0 0.0
        %743 = vmatpush2.xpose.msra.mxu0 0.0
        %744 = vmatprep.subr.mxu0 0.0
        %745 = vmatpush2.xpose.msra.mxu0 0.0
        %746 = vmatprep.subr.mxu0 0.0
        %747 = vmatpush2.xpose.msra.mxu0 0.0
        %748 = vmatprep.subr.mxu0 0.0
        %749 = vmatpush2.xpose.msra.mxu0 0.0
        %750 = vmatprep.subr.mxu0 0.0
        %751 = vmatpush2.xpose.msra.mxu0 0.0
        %752 = vmatprep.subr.mxu0 0.0
        %753 = vmatpush2.xpose.msra.mxu0 0.0
        %754 = vmatprep.subr.mxu0 0.0
        %755 = vmatpush2.xpose.msra.mxu0 0.0
        %756 = vmatprep.subr.mxu0 0.0
        %757 = vmatpush2.xpose.msra.mxu0 0.0
        %758 = vmatprep.mubr.f32.mxu0 0.0
        %759 = vmatmul.mubr.f32.gmra.mxu0 %v689
        %v760 = vpop.f32.mrf.mxu0
        %v761 = vadd.f32 0.0, %v760
        %v762 = vpop.f32.mrf.mxu0
        %763 = vdwg.mxu0
        %v765 = vsel %vm611, %v601, 0
        %v768 = vsel %vm611, %v605, 0
        %770 = vmatprep.subr.mxu0 0.0
        %771 = vmatpush1.xpose.msra.mxu0 0.0
        %772 = vmatprep.subr.mxu0 0.0
        %773 = vmatpush1.xpose.msra.mxu0 0.0
        %774 = vmatprep.subr.mxu0 0.0
        %775 = vmatpush1.xpose.msra.mxu0 0.0
        %776 = vmatprep.subr.mxu0 0.0
        %777 = vmatpush1.xpose.msra.mxu0 0.0
        %778 = vmatprep.subr.mxu0 0.0
        %779 = vmatpush1.xpose.msra.mxu0 0.0
        %780 = vmatprep.subr.mxu0 0.0
        %781 = vmatpush1.xpose.msra.mxu0 0.0
        %782 = vmatprep.subr.mxu0 0.0
        %783 = vmatpush1.xpose.msra.mxu0 0.0
        %784 = vmatprep.subr.mxu0 0.0
        %785 = vmatpush1.xpose.msra.mxu0 0.0
        %786 = vmatprep.subr.mxu0 0.0
        %787 = vmatpush1.xpose.msra.mxu0 0.0
        %788 = vmatprep.subr.mxu0 0.0
        %789 = vmatpush1.xpose.msra.mxu0 0.0
        %790 = vmatprep.subr.mxu0 0.0
        %791 = vmatpush1.xpose.msra.mxu0 0.0
        %792 = vmatprep.subr.mxu0 0.0
        %793 = vmatpush1.xpose.msra.mxu0 0.0
        %794 = vmatprep.subr.mxu0 0.0
        %795 = vmatpush1.xpose.msra.mxu0 0.0
        %796 = vmatprep.subr.mxu0 0.0
        %797 = vmatpush1.xpose.msra.mxu0 0.0
        %798 = vmatprep.subr.mxu0 0.0
        %799 = vmatpush1.xpose.msra.mxu0 0.0
        %800 = vmatprep.subr.mxu0 0.0
        %801 = vmatpush1.xpose.msra.mxu0 %v768
        %802 = vmatprep.subr.mxu0 0.0
        %803 = vmatpush2.xpose.msra.mxu0 0.0
        %804 = vmatprep.subr.mxu0 0.0
        %805 = vmatpush2.xpose.msra.mxu0 0.0
        %806 = vmatprep.subr.mxu0 0.0
        %807 = vmatpush2.xpose.msra.mxu0 0.0
        %808 = vmatprep.subr.mxu0 0.0
        %809 = vmatpush2.xpose.msra.mxu0 0.0
        %810 = vmatprep.subr.mxu0 0.0
        %811 = vmatpush2.xpose.msra.mxu0 0.0
        %812 = vmatprep.subr.mxu0 0.0
        %813 = vmatpush2.xpose.msra.mxu0 0.0
        %814 = vmatprep.subr.mxu0 0.0
        %815 = vmatpush2.xpose.msra.mxu0 0.0
        %816 = vmatprep.subr.mxu0 0.0
        %817 = vmatpush2.xpose.msra.mxu0 0.0
        %818 = vmatprep.subr.mxu0 0.0
        %819 = vmatpush2.xpose.msra.mxu0 0.0
        %820 = vmatprep.subr.mxu0 0.0
        %821 = vmatpush2.xpose.msra.mxu0 0.0
        %822 = vmatprep.subr.mxu0 0.0
        %823 = vmatpush2.xpose.msra.mxu0 0.0
        %824 = vmatprep.subr.mxu0 0.0
        %825 = vmatpush2.xpose.msra.mxu0 0.0
        %826 = vmatprep.subr.mxu0 0.0
        %827 = vmatpush2.xpose.msra.mxu0 0.0
        %828 = vmatprep.subr.mxu0 0.0
        %829 = vmatpush2.xpose.msra.mxu0 0.0
        %830 = vmatprep.subr.mxu0 0.0
        %831 = vmatpush2.xpose.msra.mxu0 0.0
        %832 = vmatprep.subr.mxu0 0.0
        %833 = vmatpush2.xpose.msra.mxu0 0.0
        %834 = vmatprep.mubr.f32.mxu0 0.0
        %835 = vmatmul.mubr.f32.gmra.mxu0 %v765
        %v836 = vpop.f32.mrf.mxu0
        %v837 = vadd.f32 0.0, %v836
        %v838 = vpop.f32.mrf.mxu0
        %839 = vdwg.mxu0
        %v841 = vsel %vm611, %v602, 0
        %v844 = vsel %vm611, %v606, 0
        %846 = vmatprep.subr.mxu0 0.0
        %847 = vmatpush1.xpose.msra.mxu0 0.0
        %848 = vmatprep.subr.mxu0 0.0
        %849 = vmatpush1.xpose.msra.mxu0 0.0
        %850 = vmatprep.subr.mxu0 0.0
        %851 = vmatpush1.xpose.msra.mxu0 0.0
        %852 = vmatprep.subr.mxu0 0.0
        %853 = vmatpush1.xpose.msra.mxu0 0.0
        %854 = vmatprep.subr.mxu0 0.0
        %855 = vmatpush1.xpose.msra.mxu0 0.0
        %856 = vmatprep.subr.mxu0 0.0
        %857 = vmatpush1.xpose.msra.mxu0 0.0
        %858 = vmatprep.subr.mxu0 0.0
        %859 = vmatpush1.xpose.msra.mxu0 0.0
        %860 = vmatprep.subr.mxu0 0.0
        %861 = vmatpush1.xpose.msra.mxu0 0.0
        %862 = vmatprep.subr.mxu0 0.0
        %863 = vmatpush1.xpose.msra.mxu0 0.0
        %864 = vmatprep.subr.mxu0 0.0
        %865 = vmatpush1.xpose.msra.mxu0 0.0
        %866 = vmatprep.subr.mxu0 0.0
        %867 = vmatpush1.xpose.msra.mxu0 0.0
        %868 = vmatprep.subr.mxu0 0.0
        %869 = vmatpush1.xpose.msra.mxu0 0.0
        %870 = vmatprep.subr.mxu0 0.0
        %871 = vmatpush1.xpose.msra.mxu0 0.0
        %872 = vmatprep.subr.mxu0 0.0
        %873 = vmatpush1.xpose.msra.mxu0 0.0
        %874 = vmatprep.subr.mxu0 0.0
        %875 = vmatpush1.xpose.msra.mxu0 0.0
        %876 = vmatprep.subr.mxu0 0.0
        %877 = vmatpush1.xpose.msra.mxu0 %v844
        %878 = vmatprep.subr.mxu0 0.0
        %879 = vmatpush2.xpose.msra.mxu0 0.0
        %880 = vmatprep.subr.mxu0 0.0
        %881 = vmatpush2.xpose.msra.mxu0 0.0
        %882 = vmatprep.subr.mxu0 0.0
        %883 = vmatpush2.xpose.msra.mxu0 0.0
        %884 = vmatprep.subr.mxu0 0.0
        %885 = vmatpush2.xpose.msra.mxu0 0.0
        %886 = vmatprep.subr.mxu0 0.0
        %887 = vmatpush2.xpose.msra.mxu0 0.0
        %888 = vmatprep.subr.mxu0 0.0
        %889 = vmatpush2.xpose.msra.mxu0 0.0
        %890 = vmatprep.subr.mxu0 0.0
        %891 = vmatpush2.xpose.msra.mxu0 0.0
        %892 = vmatprep.subr.mxu0 0.0
        %893 = vmatpush2.xpose.msra.mxu0 0.0
        %894 = vmatprep.subr.mxu0 0.0
        %895 = vmatpush2.xpose.msra.mxu0 0.0
        %896 = vmatprep.subr.mxu0 0.0
        %897 = vmatpush2.xpose.msra.mxu0 0.0
        %898 = vmatprep.subr.mxu0 0.0
        %899 = vmatpush2.xpose.msra.mxu0 0.0
        %900 = vmatprep.subr.mxu0 0.0
        %901 = vmatpush2.xpose.msra.mxu0 0.0
        %902 = vmatprep.subr.mxu0 0.0
        %903 = vmatpush2.xpose.msra.mxu0 0.0
        %904 = vmatprep.subr.mxu0 0.0
        %905 = vmatpush2.xpose.msra.mxu0 0.0
        %906 = vmatprep.subr.mxu0 0.0
        %907 = vmatpush2.xpose.msra.mxu0 0.0
        %908 = vmatprep.subr.mxu0 0.0
        %909 = vmatpush2.xpose.msra.mxu0 0.0
        %910 = vmatprep.mubr.f32.mxu0 0.0
        %911 = vmatmul.mubr.f32.gmra.mxu0 %v841
        %v912 = vpop.f32.mrf.mxu0
        %v913 = vadd.f32 0.0, %v912
        %v914 = vpop.f32.mrf.mxu0
        %915 = vdwg.mxu0
        %v916 = vmul.f32 %v685, 0.35355338
        %v917 = vmul.f32 %v761, 0.35355338
        %v918 = vmul.f32 %v837, 0.35355338
        %v919 = vmul.f32 %v913, 0.35355338
        %s920 = sld [smem:[#allocation2]]
        %v921 = vld [vmem:[%s526] sm:$0xff]
        %v922 = vld [vmem:[%s526 + $0x8] sm:$0xff]
        %v923 = vld [vmem:[%s526 + $0x10] sm:$0xff]
        %v924 = vld [vmem:[%s526 + $0x18] sm:$0xff]
        %v925 = vstv %s920
        %v926 = vmul.f32 %v925, %v921
        %v927 = vmul.f32 %v925, %v922
        %v928 = vmul.f32 %v925, %v923
        %v929 = vmul.f32 %v925, %v924
        %v930 = vadd.f32 %v916, %v926
        %v931 = vadd.f32 %v917, %v927
        %v932 = vadd.f32 %v918, %v928
        %v933 = vadd.f32 %v919, %v929
        %v934 = vld [vmem:[%s598] sm:$0x1]
        %v935 = vsub.f32 1.0, %v934
        %v936 = vmul.f32 %v935, 1e+08
        %v938 = vlaneseq
        %v939 = vshrl.u32 %v938, 7
        %v940 = vsub.s32 0, %v939
        %v941 = vrot.slane %v936, %v940
        %v943 = vsub.f32 %v930, %v941
        %v944 = vsub.f32 %v931, %v941
        %v945 = vsub.f32 %v932, %v941
        %v946 = vsub.f32 %v933, %v941
        %947 = vst.msk [vmem:[%s595] sm:$0xff] %vm611, %v943
        %948 = vst.msk [vmem:[%s595 + $0x8] sm:$0xff] %vm611, %v944
        %949 = vst.msk [vmem:[%s595 + $0x10] sm:$0xff] %vm611, %v945
        %950 = vst.msk [vmem:[%s595 + $0x18] sm:$0xff] %vm611, %v946
        %v951 = vsel %vm611, %v943, -inf
        %952 = vmax.xlane.f32.xlu0 %v951
        %v953 = vpop.xlane.xlu0 %952
        %v954 = vsel %vm611, %v944, -inf
        %955 = vmax.xlane.f32.xlu0 %v954
        %v956 = vpop.xlane.xlu0 %955
        %v957 = vsel %vm611, %v945, -inf
        %958 = vmax.xlane.f32.xlu0 %v957
        %v959 = vpop.xlane.xlu0 %958
        %v960 = vsel %vm611, %v946, -inf
        %961 = vmax.xlane.f32.xlu0 %v960
        %v962 = vpop.xlane.xlu0 %961
        %v963 = vsub.f32 %v943, %v953
        %v964 = vsub.f32 %v944, %v956
        %v965 = vsub.f32 %v945, %v959
        %v966 = vsub.f32 %v946, %v962
        %v967 = vmul.f32 %v963, 1.442695
        %v968 = vpow.pop %v967
        %v969 = vmul.f32 %v964, 1.442695
        %v970 = vpow.pop %v969
        %v971 = vmul.f32 %v965, 1.442695
        %v972 = vpow.pop %v971
        %v973 = vmul.f32 %v966, 1.442695
        %v974 = vpow.pop %v973
        %v975 = vsel %vm611, %v968, 0.0
        %976 = vadd.xlane.f32.xlu0 %v975
        %v977 = vpop.xlane.xlu0 %976
        %v978 = vsel %vm611, %v970, 0.0
        %979 = vadd.xlane.f32.xlu0 %v978
        %v980 = vpop.xlane.xlu0 %979
        %v981 = vsel %vm611, %v972, 0.0
        %982 = vadd.xlane.f32.xlu0 %v981
        %v983 = vpop.xlane.xlu0 %982
        %v984 = vsel %vm611, %v974, 0.0
        %985 = vadd.xlane.f32.xlu0 %v984
        %v986 = vpop.xlane.xlu0 %985
        %v987 = vrcp.pop %v977
        %v988 = vrcp.pop %v980
        %v989 = vrcp.pop %v983
        %v990 = vrcp.pop %v986
        %v991 = vmul.f32 %v968, %v987
        %v992 = vmul.f32 %v970, %v988
        %v993 = vmul.f32 %v972, %v989
        %v994 = vmul.f32 %v974, %v990
        %v996 = vsel %vm611, %v991, 0
        %998 = vmatprep.subr.mxu0 0.0
        %999 = vmatpush1.msra.mxu0 0.0
        %1000 = vmatprep.subr.mxu0 0.0
        %1001 = vmatpush1.msra.mxu0 0.0
        %1002 = vmatprep.subr.mxu0 0.0
        %1003 = vmatpush1.msra.mxu0 0.0
        %1004 = vmatprep.subr.mxu0 0.0
        %1005 = vmatpush1.msra.mxu0 0.0
        %1006 = vmatprep.subr.mxu0 0.0
        %1007 = vmatpush1.msra.mxu0 0.0
        %1008 = vmatprep.subr.mxu0 0.0
        %1009 = vmatpush1.msra.mxu0 0.0
        %1010 = vmatprep.subr.mxu0 0.0
        %1011 = vmatpush1.msra.mxu0 0.0
        %1012 = vmatprep.subr.mxu0 0.0
        %1013 = vmatpush1.msra.mxu0 0.0
        %1014 = vmatprep.subr.mxu0 0.0
        %1015 = vmatpush1.msra.mxu0 0.0
        %1016 = vmatprep.subr.mxu0 0.0
        %1017 = vmatpush1.msra.mxu0 0.0
        %1018 = vmatprep.subr.mxu0 0.0
        %1019 = vmatpush1.msra.mxu0 0.0
        %1020 = vmatprep.subr.mxu0 0.0
        %1021 = vmatpush1.msra.mxu0 0.0
        %1022 = vmatprep.subr.mxu0 0.0
        %1023 = vmatpush1.msra.mxu0 0.0
        %1024 = vmatprep.subr.mxu0 0.0
        %1025 = vmatpush1.msra.mxu0 0.0
        %1026 = vmatprep.subr.mxu0 0.0
        %1027 = vmatpush1.msra.mxu0 0.0
        %1028 = vmatprep.subr.mxu0 0.0
        %1029 = vmatpush1.msra.mxu0 %v607
        %1030 = vmatprep.subr.mxu0 0.0
        %1031 = vmatpush2.msra.mxu0 0.0
        %1032 = vmatprep.subr.mxu0 0.0
        %1033 = vmatpush2.msra.mxu0 0.0
        %1034 = vmatprep.subr.mxu0 0.0
        %1035 = vmatpush2.msra.mxu0 0.0
        %1036 = vmatprep.subr.mxu0 0.0
        %1037 = vmatpush2.msra.mxu0 0.0
        %1038 = vmatprep.subr.mxu0 0.0
        %1039 = vmatpush2.msra.mxu0 0.0
        %1040 = vmatprep.subr.mxu0 0.0
        %1041 = vmatpush2.msra.mxu0 0.0
        %1042 = vmatprep.subr.mxu0 0.0
        %1043 = vmatpush2.msra.mxu0 0.0
        %1044 = vmatprep.subr.mxu0 0.0
        %1045 = vmatpush2.msra.mxu0 0.0
        %1046 = vmatprep.subr.mxu0 0.0
        %1047 = vmatpush2.msra.mxu0 0.0
        %1048 = vmatprep.subr.mxu0 0.0
        %1049 = vmatpush2.msra.mxu0 0.0
        %1050 = vmatprep.subr.mxu0 0.0
        %1051 = vmatpush2.msra.mxu0 0.0
        %1052 = vmatprep.subr.mxu0 0.0
        %1053 = vmatpush2.msra.mxu0 0.0
        %1054 = vmatprep.subr.mxu0 0.0
        %1055 = vmatpush2.msra.mxu0 0.0
        %1056 = vmatprep.subr.mxu0 0.0
        %1057 = vmatpush2.msra.mxu0 0.0
        %1058 = vmatprep.subr.mxu0 0.0
        %1059 = vmatpush2.msra.mxu0 0.0
        %1060 = vmatprep.subr.mxu0 0.0
        %1061 = vmatpush2.msra.mxu0 0.0
        %1062 = vmatprep.mubr.f32.mxu0 0.0
        %1063 = vmatmul.mubr.f32.gmra.mxu0 %v996
        %v1064 = vpop.f32.mrf.mxu0
        %v1065 = vadd.f32 0.0, %v1064
        %v1066 = vpop.f32.mrf.mxu0
        %1067 = vdwg.mxu0
        %v1069 = vsel %vm611, %v992, 0
        %1071 = vmatprep.subr.mxu0 0.0
        %1072 = vmatpush1.msra.mxu0 0.0
        %1073 = vmatprep.subr.mxu0 0.0
        %1074 = vmatpush1.msra.mxu0 0.0
        %1075 = vmatprep.subr.mxu0 0.0
        %1076 = vmatpush1.msra.mxu0 0.0
        %1077 = vmatprep.subr.mxu0 0.0
        %1078 = vmatpush1.msra.mxu0 0.0
        %1079 = vmatprep.subr.mxu0 0.0
        %1080 = vmatpush1.msra.mxu0 0.0
        %1081 = vmatprep.subr.mxu0 0.0
        %1082 = vmatpush1.msra.mxu0 0.0
        %1083 = vmatprep.subr.mxu0 0.0
        %1084 = vmatpush1.msra.mxu0 0.0
        %1085 = vmatprep.subr.mxu0 0.0
        %1086 = vmatpush1.msra.mxu0 0.0
        %1087 = vmatprep.subr.mxu0 0.0
        %1088 = vmatpush1.msra.mxu0 0.0
        %1089 = vmatprep.subr.mxu0 0.0
        %1090 = vmatpush1.msra.mxu0 0.0
        %1091 = vmatprep.subr.mxu0 0.0
        %1092 = vmatpush1.msra.mxu0 0.0
        %1093 = vmatprep.subr.mxu0 0.0
        %1094 = vmatpush1.msra.mxu0 0.0
        %1095 = vmatprep.subr.mxu0 0.0
        %1096 = vmatpush1.msra.mxu0 0.0
        %1097 = vmatprep.subr.mxu0 0.0
        %1098 = vmatpush1.msra.mxu0 0.0
        %1099 = vmatprep.subr.mxu0 0.0
        %1100 = vmatpush1.msra.mxu0 0.0
        %1101 = vmatprep.subr.mxu0 0.0
        %1102 = vmatpush1.msra.mxu0 %v608
        %1103 = vmatprep.subr.mxu0 0.0
        %1104 = vmatpush2.msra.mxu0 0.0
        %1105 = vmatprep.subr.mxu0 0.0
        %1106 = vmatpush2.msra.mxu0 0.0
        %1107 = vmatprep.subr.mxu0 0.0
        %1108 = vmatpush2.msra.mxu0 0.0
        %1109 = vmatprep.subr.mxu0 0.0
        %1110 = vmatpush2.msra.mxu0 0.0
        %1111 = vmatprep.subr.mxu0 0.0
        %1112 = vmatpush2.msra.mxu0 0.0
        %1113 = vmatprep.subr.mxu0 0.0
        %1114 = vmatpush2.msra.mxu0 0.0
        %1115 = vmatprep.subr.mxu0 0.0
        %1116 = vmatpush2.msra.mxu0 0.0
        %1117 = vmatprep.subr.mxu0 0.0
        %1118 = vmatpush2.msra.mxu0 0.0
        %1119 = vmatprep.subr.mxu0 0.0
        %1120 = vmatpush2.msra.mxu0 0.0
        %1121 = vmatprep.subr.mxu0 0.0
        %1122 = vmatpush2.msra.mxu0 0.0
        %1123 = vmatprep.subr.mxu0 0.0
        %1124 = vmatpush2.msra.mxu0 0.0
        %1125 = vmatprep.subr.mxu0 0.0
        %1126 = vmatpush2.msra.mxu0 0.0
        %1127 = vmatprep.subr.mxu0 0.0
        %1128 = vmatpush2.msra.mxu0 0.0
        %1129 = vmatprep.subr.mxu0 0.0
        %1130 = vmatpush2.msra.mxu0 0.0
        %1131 = vmatprep.subr.mxu0 0.0
        %1132 = vmatpush2.msra.mxu0 0.0
        %1133 = vmatprep.subr.mxu0 0.0
        %1134 = vmatpush2.msra.mxu0 0.0
        %1135 = vmatprep.mubr.f32.mxu0 0.0
        %1136 = vmatmul.mubr.f32.gmra.mxu0 %v1069
        %v1137 = vpop.f32.mrf.mxu0
        %v1138 = vadd.f32 0.0, %v1137
        %v1139 = vpop.f32.mrf.mxu0
        %1140 = vdwg.mxu0
        %v1142 = vsel %vm611, %v993, 0
        %1144 = vmatprep.subr.mxu0 0.0
        %1145 = vmatpush1.msra.mxu0 0.0
        %1146 = vmatprep.subr.mxu0 0.0
        %1147 = vmatpush1.msra.mxu0 0.0
        %1148 = vmatprep.subr.mxu0 0.0
        %1149 = vmatpush1.msra.mxu0 0.0
        %1150 = vmatprep.subr.mxu0 0.0
        %1151 = vmatpush1.msra.mxu0 0.0
        %1152 = vmatprep.subr.mxu0 0.0
        %1153 = vmatpush1.msra.mxu0 0.0
        %1154 = vmatprep.subr.mxu0 0.0
        %1155 = vmatpush1.msra.mxu0 0.0
        %1156 = vmatprep.subr.mxu0 0.0
        %1157 = vmatpush1.msra.mxu0 0.0
        %1158 = vmatprep.subr.mxu0 0.0
        %1159 = vmatpush1.msra.mxu0 0.0
        %1160 = vmatprep.subr.mxu0 0.0
        %1161 = vmatpush1.msra.mxu0 0.0
        %1162 = vmatprep.subr.mxu0 0.0
        %1163 = vmatpush1.msra.mxu0 0.0
        %1164 = vmatprep.subr.mxu0 0.0
        %1165 = vmatpush1.msra.mxu0 0.0
        %1166 = vmatprep.subr.mxu0 0.0
        %1167 = vmatpush1.msra.mxu0 0.0
        %1168 = vmatprep.subr.mxu0 0.0
        %1169 = vmatpush1.msra.mxu0 0.0
        %1170 = vmatprep.subr.mxu0 0.0
        %1171 = vmatpush1.msra.mxu0 0.0
        %1172 = vmatprep.subr.mxu0 0.0
        %1173 = vmatpush1.msra.mxu0 0.0
        %1174 = vmatprep.subr.mxu0 0.0
        %1175 = vmatpush1.msra.mxu0 %v609
        %1176 = vmatprep.subr.mxu0 0.0
        %1177 = vmatpush2.msra.mxu0 0.0
        %1178 = vmatprep.subr.mxu0 0.0
        %1179 = vmatpush2.msra.mxu0 0.0
        %1180 = vmatprep.subr.mxu0 0.0
        %1181 = vmatpush2.msra.mxu0 0.0
        %1182 = vmatprep.subr.mxu0 0.0
        %1183 = vmatpush2.msra.mxu0 0.0
        %1184 = vmatprep.subr.mxu0 0.0
        %1185 = vmatpush2.msra.mxu0 0.0
        %1186 = vmatprep.subr.mxu0 0.0
        %1187 = vmatpush2.msra.mxu0 0.0
        %1188 = vmatprep.subr.mxu0 0.0
        %1189 = vmatpush2.msra.mxu0 0.0
        %1190 = vmatprep.subr.mxu0 0.0
        %1191 = vmatpush2.msra.mxu0 0.0
        %1192 = vmatprep.subr.mxu0 0.0
        %1193 = vmatpush2.msra.mxu0 0.0
        %1194 = vmatprep.subr.mxu0 0.0
        %1195 = vmatpush2.msra.mxu0 0.0
        %1196 = vmatprep.subr.mxu0 0.0
        %1197 = vmatpush2.msra.mxu0 0.0
        %1198 = vmatprep.subr.mxu0 0.0
        %1199 = vmatpush2.msra.mxu0 0.0
        %1200 = vmatprep.subr.mxu0 0.0
        %1201 = vmatpush2.msra.mxu0 0.0
        %1202 = vmatprep.subr.mxu0 0.0
        %1203 = vmatpush2.msra.mxu0 0.0
        %1204 = vmatprep.subr.mxu0 0.0
        %1205 = vmatpush2.msra.mxu0 0.0
        %1206 = vmatprep.subr.mxu0 0.0
        %1207 = vmatpush2.msra.mxu0 0.0
        %1208 = vmatprep.mubr.f32.mxu0 0.0
        %1209 = vmatmul.mubr.f32.gmra.mxu0 %v1142
        %v1210 = vpop.f32.mrf.mxu0
        %v1211 = vadd.f32 0.0, %v1210
        %v1212 = vpop.f32.mrf.mxu0
        %1213 = vdwg.mxu0
        %v1215 = vsel %vm611, %v994, 0
        %1217 = vmatprep.subr.mxu0 0.0
        %1218 = vmatpush1.msra.mxu0 0.0
        %1219 = vmatprep.subr.mxu0 0.0
        %1220 = vmatpush1.msra.mxu0 0.0
        %1221 = vmatprep.subr.mxu0 0.0
        %1222 = vmatpush1.msra.mxu0 0.0
        %1223 = vmatprep.subr.mxu0 0.0
        %1224 = vmatpush1.msra.mxu0 0.0
        %1225 = vmatprep.subr.mxu0 0.0
        %1226 = vmatpush1.msra.mxu0 0.0
        %1227 = vmatprep.subr.mxu0 0.0
        %1228 = vmatpush1.msra.mxu0 0.0
        %1229 = vmatprep.subr.mxu0 0.0
        %1230 = vmatpush1.msra.mxu0 0.0
        %1231 = vmatprep.subr.mxu0 0.0
        %1232 = vmatpush1.msra.mxu0 0.0
        %1233 = vmatprep.subr.mxu0 0.0
        %1234 = vmatpush1.msra.mxu0 0.0
        %1235 = vmatprep.subr.mxu0 0.0
        %1236 = vmatpush1.msra.mxu0 0.0
        %1237 = vmatprep.subr.mxu0 0.0
        %1238 = vmatpush1.msra.mxu0 0.0
        %1239 = vmatprep.subr.mxu0 0.0
        %1240 = vmatpush1.msra.mxu0 0.0
        %1241 = vmatprep.subr.mxu0 0.0
        %1242 = vmatpush1.msra.mxu0 0.0
        %1243 = vmatprep.subr.mxu0 0.0
        %1244 = vmatpush1.msra.mxu0 0.0
        %1245 = vmatprep.subr.mxu0 0.0
        %1246 = vmatpush1.msra.mxu0 0.0
        %1247 = vmatprep.subr.mxu0 0.0
        %1248 = vmatpush1.msra.mxu0 %v610
        %1249 = vmatprep.subr.mxu0 0.0
        %1250 = vmatpush2.msra.mxu0 0.0
        %1251 = vmatprep.subr.mxu0 0.0
        %1252 = vmatpush2.msra.mxu0 0.0
        %1253 = vmatprep.subr.mxu0 0.0
        %1254 = vmatpush2.msra.mxu0 0.0
        %1255 = vmatprep.subr.mxu0 0.0
        %1256 = vmatpush2.msra.mxu0 0.0
        %1257 = vmatprep.subr.mxu0 0.0
        %1258 = vmatpush2.msra.mxu0 0.0
        %1259 = vmatprep.subr.mxu0 0.0
        %1260 = vmatpush2.msra.mxu0 0.0
        %1261 = vmatprep.subr.mxu0 0.0
        %1262 = vmatpush2.msra.mxu0 0.0
        %1263 = vmatprep.subr.mxu0 0.0
        %1264 = vmatpush2.msra.mxu0 0.0
        %1265 = vmatprep.subr.mxu0 0.0
        %1266 = vmatpush2.msra.mxu0 0.0
        %1267 = vmatprep.subr.mxu0 0.0
        %1268 = vmatpush2.msra.mxu0 0.0
        %1269 = vmatprep.subr.mxu0 0.0
        %1270 = vmatpush2.msra.mxu0 0.0
        %1271 = vmatprep.subr.mxu0 0.0
        %1272 = vmatpush2.msra.mxu0 0.0
        %1273 = vmatprep.subr.mxu0 0.0
        %1274 = vmatpush2.msra.mxu0 0.0
        %1275 = vmatprep.subr.mxu0 0.0
        %1276 = vmatpush2.msra.mxu0 0.0
        %1277 = vmatprep.subr.mxu0 0.0
        %1278 = vmatpush2.msra.mxu0 0.0
        %1279 = vmatprep.subr.mxu0 0.0
        %1280 = vmatpush2.msra.mxu0 0.0
        %1281 = vmatprep.mubr.f32.mxu0 0.0
        %1282 = vmatmul.mubr.f32.gmra.mxu0 %v1215
        %v1283 = vpop.f32.mrf.mxu0
        %v1284 = vadd.f32 0.0, %v1283
        %v1285 = vpop.f32.mrf.mxu0
        %1286 = vdwg.mxu0
        %v1287 = vld [vmem:[#allocation11] sm:$0xff]
        %v1288 = vld [vmem:[#allocation11 + $0x8] sm:$0xff]
        %v1289 = vld [vmem:[#allocation11 + $0x10] sm:$0xff]
        %v1290 = vld [vmem:[#allocation11 + $0x18] sm:$0xff]
        %v1291 = vld [vmem:[#allocation12] sm:$0xff]
        %v1292 = vld [vmem:[#allocation12 + $0x8] sm:$0xff]
        %v1293 = vld [vmem:[#allocation12 + $0x10] sm:$0xff]
        %v1294 = vld [vmem:[#allocation12 + $0x18] sm:$0xff]
        %v1296 = vsel %vm611, %v1065, 0
        %1298 = vmatprep.subr.mxu0 0.0
        %1299 = vmatpush1.msra.mxu0 0.0
        %1300 = vmatprep.subr.mxu0 0.0
        %1301 = vmatpush1.msra.mxu0 0.0
        %1302 = vmatprep.subr.mxu0 0.0
        %1303 = vmatpush1.msra.mxu0 0.0
        %1304 = vmatprep.subr.mxu0 0.0
        %1305 = vmatpush1.msra.mxu0 0.0
        %1306 = vmatprep.subr.mxu0 0.0
        %1307 = vmatpush1.msra.mxu0 0.0
        %1308 = vmatprep.subr.mxu0 0.0
        %1309 = vmatpush1.msra.mxu0 0.0
        %1310 = vmatprep.subr.mxu0 0.0
        %1311 = vmatpush1.msra.mxu0 0.0
        %1312 = vmatprep.subr.mxu0 0.0
        %1313 = vmatpush1.msra.mxu0 0.0
        %1314 = vmatprep.subr.mxu0 0.0
        %1315 = vmatpush1.msra.mxu0 0.0
        %1316 = vmatprep.subr.mxu0 0.0
        %1317 = vmatpush1.msra.mxu0 0.0
        %1318 = vmatprep.subr.mxu0 0.0
        %1319 = vmatpush1.msra.mxu0 0.0
        %1320 = vmatprep.subr.mxu0 0.0
        %1321 = vmatpush1.msra.mxu0 0.0
        %1322 = vmatprep.subr.mxu0 0.0
        %1323 = vmatpush1.msra.mxu0 0.0
        %1324 = vmatprep.subr.mxu0 0.0
        %1325 = vmatpush1.msra.mxu0 0.0
        %1326 = vmatprep.subr.mxu0 0.0
        %1327 = vmatpush1.msra.mxu0 0.0
        %1328 = vmatprep.subr.mxu0 0.0
        %1329 = vmatpush1.msra.mxu0 %v1291
        %1330 = vmatprep.subr.mxu0 0.0
        %1331 = vmatpush2.msra.mxu0 0.0
        %1332 = vmatprep.subr.mxu0 0.0
        %1333 = vmatpush2.msra.mxu0 0.0
        %1334 = vmatprep.subr.mxu0 0.0
        %1335 = vmatpush2.msra.mxu0 0.0
        %1336 = vmatprep.subr.mxu0 0.0
        %1337 = vmatpush2.msra.mxu0 0.0
        %1338 = vmatprep.subr.mxu0 0.0
        %1339 = vmatpush2.msra.mxu0 0.0
        %1340 = vmatprep.subr.mxu0 0.0
        %1341 = vmatpush2.msra.mxu0 0.0
        %1342 = vmatprep.subr.mxu0 0.0
        %1343 = vmatpush2.msra.mxu0 0.0
        %1344 = vmatprep.subr.mxu0 0.0
        %1345 = vmatpush2.msra.mxu0 0.0
        %1346 = vmatprep.subr.mxu0 0.0
        %1347 = vmatpush2.msra.mxu0 0.0
        %1348 = vmatprep.subr.mxu0 0.0
        %1349 = vmatpush2.msra.mxu0 0.0
        %1350 = vmatprep.subr.mxu0 0.0
        %1351 = vmatpush2.msra.mxu0 0.0
        %1352 = vmatprep.subr.mxu0 0.0
        %1353 = vmatpush2.msra.mxu0 0.0
        %1354 = vmatprep.subr.mxu0 0.0
        %1355 = vmatpush2.msra.mxu0 0.0
        %1356 = vmatprep.subr.mxu0 0.0
        %1357 = vmatpush2.msra.mxu0 0.0
        %1358 = vmatprep.subr.mxu0 0.0
        %1359 = vmatpush2.msra.mxu0 0.0
        %1360 = vmatprep.subr.mxu0 0.0
        %1361 = vmatpush2.msra.mxu0 0.0
        %1362 = vmatprep.mubr.f32.mxu0 0.0
        %1363 = vmatmul.mubr.f32.gmra.mxu0 %v1296
        %v1364 = vpop.f32.mrf.mxu0
        %v1365 = vadd.f32 0.0, %v1364
        %v1366 = vpop.f32.mrf.mxu0
        %1367 = vdwg.mxu0
        %v1369 = vsel %vm611, %v1138, 0
        %1371 = vmatprep.subr.mxu0 0.0
        %1372 = vmatpush1.msra.mxu0 0.0
        %1373 = vmatprep.subr.mxu0 0.0
        %1374 = vmatpush1.msra.mxu0 0.0
        %1375 = vmatprep.subr.mxu0 0.0
        %1376 = vmatpush1.msra.mxu0 0.0
        %1377 = vmatprep.subr.mxu0 0.0
        %1378 = vmatpush1.msra.mxu0 0.0
        %1379 = vmatprep.subr.mxu0 0.0
        %1380 = vmatpush1.msra.mxu0 0.0
        %1381 = vmatprep.subr.mxu0 0.0
        %1382 = vmatpush1.msra.mxu0 0.0
        %1383 = vmatprep.subr.mxu0 0.0
        %1384 = vmatpush1.msra.mxu0 0.0
        %1385 = vmatprep.subr.mxu0 0.0
        %1386 = vmatpush1.msra.mxu0 0.0
        %1387 = vmatprep.subr.mxu0 0.0
        %1388 = vmatpush1.msra.mxu0 0.0
        %1389 = vmatprep.subr.mxu0 0.0
        %1390 = vmatpush1.msra.mxu0 0.0
        %1391 = vmatprep.subr.mxu0 0.0
        %1392 = vmatpush1.msra.mxu0 0.0
        %1393 = vmatprep.subr.mxu0 0.0
        %1394 = vmatpush1.msra.mxu0 0.0
        %1395 = vmatprep.subr.mxu0 0.0
        %1396 = vmatpush1.msra.mxu0 0.0
        %1397 = vmatprep.subr.mxu0 0.0
        %1398 = vmatpush1.msra.mxu0 0.0
        %1399 = vmatprep.subr.mxu0 0.0
        %1400 = vmatpush1.msra.mxu0 0.0
        %1401 = vmatprep.subr.mxu0 0.0
        %1402 = vmatpush1.msra.mxu0 %v1292
        %1403 = vmatprep.subr.mxu0 0.0
        %1404 = vmatpush2.msra.mxu0 0.0
        %1405 = vmatprep.subr.mxu0 0.0
        %1406 = vmatpush2.msra.mxu0 0.0
        %1407 = vmatprep.subr.mxu0 0.0
        %1408 = vmatpush2.msra.mxu0 0.0
        %1409 = vmatprep.subr.mxu0 0.0
        %1410 = vmatpush2.msra.mxu0 0.0
        %1411 = vmatprep.subr.mxu0 0.0
        %1412 = vmatpush2.msra.mxu0 0.0
        %1413 = vmatprep.subr.mxu0 0.0
        %1414 = vmatpush2.msra.mxu0 0.0
        %1415 = vmatprep.subr.mxu0 0.0
        %1416 = vmatpush2.msra.mxu0 0.0
        %1417 = vmatprep.subr.mxu0 0.0
        %1418 = vmatpush2.msra.mxu0 0.0
        %1419 = vmatprep.subr.mxu0 0.0
        %1420 = vmatpush2.msra.mxu0 0.0
        %1421 = vmatprep.subr.mxu0 0.0
        %1422 = vmatpush2.msra.mxu0 0.0
        %1423 = vmatprep.subr.mxu0 0.0
        %1424 = vmatpush2.msra.mxu0 0.0
        %1425 = vmatprep.subr.mxu0 0.0
        %1426 = vmatpush2.msra.mxu0 0.0
        %1427 = vmatprep.subr.mxu0 0.0
        %1428 = vmatpush2.msra.mxu0 0.0
        %1429 = vmatprep.subr.mxu0 0.0
        %1430 = vmatpush2.msra.mxu0 0.0
        %1431 = vmatprep.subr.mxu0 0.0
        %1432 = vmatpush2.msra.mxu0 0.0
        %1433 = vmatprep.subr.mxu0 0.0
        %1434 = vmatpush2.msra.mxu0 0.0
        %1435 = vmatprep.mubr.f32.mxu0 0.0
        %1436 = vmatmul.mubr.f32.gmra.mxu0 %v1369
        %v1437 = vpop.f32.mrf.mxu0
        %v1438 = vadd.f32 0.0, %v1437
        %v1439 = vpop.f32.mrf.mxu0
        %1440 = vdwg.mxu0
        %v1442 = vsel %vm611, %v1211, 0
        %1444 = vmatprep.subr.mxu0 0.0
        %1445 = vmatpush1.msra.mxu0 0.0
        %1446 = vmatprep.subr.mxu0 0.0
        %1447 = vmatpush1.msra.mxu0 0.0
        %1448 = vmatprep.subr.mxu0 0.0
        %1449 = vmatpush1.msra.mxu0 0.0
        %1450 = vmatprep.subr.mxu0 0.0
        %1451 = vmatpush1.msra.mxu0 0.0
        %1452 = vmatprep.subr.mxu0 0.0
        %1453 = vmatpush1.msra.mxu0 0.0
        %1454 = vmatprep.subr.mxu0 0.0
        %1455 = vmatpush1.msra.mxu0 0.0
        %1456 = vmatprep.subr.mxu0 0.0
        %1457 = vmatpush1.msra.mxu0 0.0
        %1458 = vmatprep.subr.mxu0 0.0
        %1459 = vmatpush1.msra.mxu0 0.0
        %1460 = vmatprep.subr.mxu0 0.0
        %1461 = vmatpush1.msra.mxu0 0.0
        %1462 = vmatprep.subr.mxu0 0.0
        %1463 = vmatpush1.msra.mxu0 0.0
        %1464 = vmatprep.subr.mxu0 0.0
        %1465 = vmatpush1.msra.mxu0 0.0
        %1466 = vmatprep.subr.mxu0 0.0
        %1467 = vmatpush1.msra.mxu0 0.0
        %1468 = vmatprep.subr.mxu0 0.0
        %1469 = vmatpush1.msra.mxu0 0.0
        %1470 = vmatprep.subr.mxu0 0.0
        %1471 = vmatpush1.msra.mxu0 0.0
        %1472 = vmatprep.subr.mxu0 0.0
        %1473 = vmatpush1.msra.mxu0 0.0
        %1474 = vmatprep.subr.mxu0 0.0
        %1475 = vmatpush1.msra.mxu0 %v1293
        %1476 = vmatprep.subr.mxu0 0.0
        %1477 = vmatpush2.msra.mxu0 0.0
        %1478 = vmatprep.subr.mxu0 0.0
        %1479 = vmatpush2.msra.mxu0 0.0
        %1480 = vmatprep.subr.mxu0 0.0
        %1481 = vmatpush2.msra.mxu0 0.0
        %1482 = vmatprep.subr.mxu0 0.0
        %1483 = vmatpush2.msra.mxu0 0.0
        %1484 = vmatprep.subr.mxu0 0.0
        %1485 = vmatpush2.msra.mxu0 0.0
        %1486 = vmatprep.subr.mxu0 0.0
        %1487 = vmatpush2.msra.mxu0 0.0
        %1488 = vmatprep.subr.mxu0 0.0
        %1489 = vmatpush2.msra.mxu0 0.0
        %1490 = vmatprep.subr.mxu0 0.0
        %1491 = vmatpush2.msra.mxu0 0.0
        %1492 = vmatprep.subr.mxu0 0.0
        %1493 = vmatpush2.msra.mxu0 0.0
        %1494 = vmatprep.subr.mxu0 0.0
        %1495 = vmatpush2.msra.mxu0 0.0
        %1496 = vmatprep.subr.mxu0 0.0
        %1497 = vmatpush2.msra.mxu0 0.0
        %1498 = vmatprep.subr.mxu0 0.0
        %1499 = vmatpush2.msra.mxu0 0.0
        %1500 = vmatprep.subr.mxu0 0.0
        %1501 = vmatpush2.msra.mxu0 0.0
        %1502 = vmatprep.subr.mxu0 0.0
        %1503 = vmatpush2.msra.mxu0 0.0
        %1504 = vmatprep.subr.mxu0 0.0
        %1505 = vmatpush2.msra.mxu0 0.0
        %1506 = vmatprep.subr.mxu0 0.0
        %1507 = vmatpush2.msra.mxu0 0.0
        %1508 = vmatprep.mubr.f32.mxu0 0.0
        %1509 = vmatmul.mubr.f32.gmra.mxu0 %v1442
        %v1510 = vpop.f32.mrf.mxu0
        %v1511 = vadd.f32 0.0, %v1510
        %v1512 = vpop.f32.mrf.mxu0
        %1513 = vdwg.mxu0
        %v1515 = vsel %vm611, %v1284, 0
        %1517 = vmatprep.subr.mxu0 0.0
        %1518 = vmatpush1.msra.mxu0 0.0
        %1519 = vmatprep.subr.mxu0 0.0
        %1520 = vmatpush1.msra.mxu0 0.0
        %1521 = vmatprep.subr.mxu0 0.0
        %1522 = vmatpush1.msra.mxu0 0.0
        %1523 = vmatprep.subr.mxu0 0.0
        %1524 = vmatpush1.msra.mxu0 0.0
        %1525 = vmatprep.subr.mxu0 0.0
        %1526 = vmatpush1.msra.mxu0 0.0
        %1527 = vmatprep.subr.mxu0 0.0
        %1528 = vmatpush1.msra.mxu0 0.0
        %1529 = vmatprep.subr.mxu0 0.0
        %1530 = vmatpush1.msra.mxu0 0.0
        %1531 = vmatprep.subr.mxu0 0.0
        %1532 = vmatpush1.msra.mxu0 0.0
        %1533 = vmatprep.subr.mxu0 0.0
        %1534 = vmatpush1.msra.mxu0 0.0
        %1535 = vmatprep.subr.mxu0 0.0
        %1536 = vmatpush1.msra.mxu0 0.0
        %1537 = vmatprep.subr.mxu0 0.0
        %1538 = vmatpush1.msra.mxu0 0.0
        %1539 = vmatprep.subr.mxu0 0.0
        %1540 = vmatpush1.msra.mxu0 0.0
        %1541 = vmatprep.subr.mxu0 0.0
        %1542 = vmatpush1.msra.mxu0 0.0
        %1543 = vmatprep.subr.mxu0 0.0
        %1544 = vmatpush1.msra.mxu0 0.0
        %1545 = vmatprep.subr.mxu0 0.0
        %1546 = vmatpush1.msra.mxu0 0.0
        %1547 = vmatprep.subr.mxu0 0.0
        %1548 = vmatpush1.msra.mxu0 %v1294
        %1549 = vmatprep.subr.mxu0 0.0
        %1550 = vmatpush2.msra.mxu0 0.0
        %1551 = vmatprep.subr.mxu0 0.0
        %1552 = vmatpush2.msra.mxu0 0.0
        %1553 = vmatprep.subr.mxu0 0.0
        %1554 = vmatpush2.msra.mxu0 0.0
        %1555 = vmatprep.subr.mxu0 0.0
        %1556 = vmatpush2.msra.mxu0 0.0
        %1557 = vmatprep.subr.mxu0 0.0
        %1558 = vmatpush2.msra.mxu0 0.0
        %1559 = vmatprep.subr.mxu0 0.0
        %1560 = vmatpush2.msra.mxu0 0.0
        %1561 = vmatprep.subr.mxu0 0.0
        %1562 = vmatpush2.msra.mxu0 0.0
        %1563 = vmatprep.subr.mxu0 0.0
        %1564 = vmatpush2.msra.mxu0 0.0
        %1565 = vmatprep.subr.mxu0 0.0
        %1566 = vmatpush2.msra.mxu0 0.0
        %1567 = vmatprep.subr.mxu0 0.0
        %1568 = vmatpush2.msra.mxu0 0.0
        %1569 = vmatprep.subr.mxu0 0.0
        %1570 = vmatpush2.msra.mxu0 0.0
        %1571 = vmatprep.subr.mxu0 0.0
        %1572 = vmatpush2.msra.mxu0 0.0
        %1573 = vmatprep.subr.mxu0 0.0
        %1574 = vmatpush2.msra.mxu0 0.0
        %1575 = vmatprep.subr.mxu0 0.0
        %1576 = vmatpush2.msra.mxu0 0.0
        %1577 = vmatprep.subr.mxu0 0.0
        %1578 = vmatpush2.msra.mxu0 0.0
        %1579 = vmatprep.subr.mxu0 0.0
        %1580 = vmatpush2.msra.mxu0 0.0
        %1581 = vmatprep.mubr.f32.mxu0 0.0
        %1582 = vmatmul.mubr.f32.gmra.mxu0 %v1515
        %v1583 = vpop.f32.mrf.mxu0
        %v1584 = vadd.f32 0.0, %v1583
        %v1585 = vpop.f32.mrf.mxu0
        %1586 = vdwg.mxu0
        %1587 = vmatprep.subr.mxu0 0.0
        %1588 = vmatpush1.msra.mxu0 0.0
        %1589 = vmatprep.subr.mxu0 0.0
        %1590 = vmatpush1.msra.mxu0 0.0
        %1591 = vmatprep.subr.mxu0 0.0
        %1592 = vmatpush1.msra.mxu0 0.0
        %1593 = vmatprep.subr.mxu0 0.0
        %1594 = vmatpush1.msra.mxu0 0.0
        %1595 = vmatprep.subr.mxu0 0.0
        %1596 = vmatpush1.msra.mxu0 0.0
        %1597 = vmatprep.subr.mxu0 0.0
        %1598 = vmatpush1.msra.mxu0 0.0
        %1599 = vmatprep.subr.mxu0 0.0
        %1600 = vmatpush1.msra.mxu0 0.0
        %1601 = vmatprep.subr.mxu0 0.0
        %1602 = vmatpush1.msra.mxu0 0.0
        %1603 = vmatprep.subr.mxu0 0.0
        %1604 = vmatpush1.msra.mxu0 0.0
        %1605 = vmatprep.subr.mxu0 0.0
        %1606 = vmatpush1.msra.mxu0 0.0
        %1607 = vmatprep.subr.mxu0 0.0
        %1608 = vmatpush1.msra.mxu0 0.0
        %1609 = vmatprep.subr.mxu0 0.0
        %1610 = vmatpush1.msra.mxu0 0.0
        %1611 = vmatprep.subr.mxu0 0.0
        %1612 = vmatpush1.msra.mxu0 0.0
        %1613 = vmatprep.subr.mxu0 0.0
        %1614 = vmatpush1.msra.mxu0 0.0
        %1615 = vmatprep.subr.mxu0 0.0
        %1616 = vmatpush1.msra.mxu0 0.0
        %1617 = vmatprep.subr.mxu0 0.0
        %1618 = vmatpush1.msra.mxu0 %v1287
        %1619 = vmatprep.subr.mxu0 0.0
        %1620 = vmatpush2.msra.mxu0 0.0
        %1621 = vmatprep.subr.mxu0 0.0
        %1622 = vmatpush2.msra.mxu0 0.0
        %1623 = vmatprep.subr.mxu0 0.0
        %1624 = vmatpush2.msra.mxu0 0.0
        %1625 = vmatprep.subr.mxu0 0.0
        %1626 = vmatpush2.msra.mxu0 0.0
        %1627 = vmatprep.subr.mxu0 0.0
        %1628 = vmatpush2.msra.mxu0 0.0
        %1629 = vmatprep.subr.mxu0 0.0
        %1630 = vmatpush2.msra.mxu0 0.0
        %1631 = vmatprep.subr.mxu0 0.0
        %1632 = vmatpush2.msra.mxu0 0.0
        %1633 = vmatprep.subr.mxu0 0.0
        %1634 = vmatpush2.msra.mxu0 0.0
        %1635 = vmatprep.subr.mxu0 0.0
        %1636 = vmatpush2.msra.mxu0 0.0
        %1637 = vmatprep.subr.mxu0 0.0
        %1638 = vmatpush2.msra.mxu0 0.0
        %1639 = vmatprep.subr.mxu0 0.0
        %1640 = vmatpush2.msra.mxu0 0.0
        %1641 = vmatprep.subr.mxu0 0.0
        %1642 = vmatpush2.msra.mxu0 0.0
        %1643 = vmatprep.subr.mxu0 0.0
        %1644 = vmatpush2.msra.mxu0 0.0
        %1645 = vmatprep.subr.mxu0 0.0
        %1646 = vmatpush2.msra.mxu0 0.0
        %1647 = vmatprep.subr.mxu0 0.0
        %1648 = vmatpush2.msra.mxu0 0.0
        %1649 = vmatprep.subr.mxu0 0.0
        %1650 = vmatpush2.msra.mxu0 0.0
        %1651 = vmatprep.mubr.f32.mxu0 0.0
        %1652 = vmatmul.mubr.f32.gmra.mxu0 %v613
        %v1653 = vpop.f32.mrf.mxu0
        %v1654 = vadd.f32 %v1365, %v1653
        %v1655 = vpop.f32.mrf.mxu0
        %1656 = vdwg.mxu0
        %1657 = vmatprep.subr.mxu0 0.0
        %1658 = vmatpush1.msra.mxu0 0.0
        %1659 = vmatprep.subr.mxu0 0.0
        %1660 = vmatpush1.msra.mxu0 0.0
        %1661 = vmatprep.subr.mxu0 0.0
        %1662 = vmatpush1.msra.mxu0 0.0
        %1663 = vmatprep.subr.mxu0 0.0
        %1664 = vmatpush1.msra.mxu0 0.0
        %1665 = vmatprep.subr.mxu0 0.0
        %1666 = vmatpush1.msra.mxu0 0.0
        %1667 = vmatprep.subr.mxu0 0.0
        %1668 = vmatpush1.msra.mxu0 0.0
        %1669 = vmatprep.subr.mxu0 0.0
        %1670 = vmatpush1.msra.mxu0 0.0
        %1671 = vmatprep.subr.mxu0 0.0
        %1672 = vmatpush1.msra.mxu0 0.0
        %1673 = vmatprep.subr.mxu0 0.0
        %1674 = vmatpush1.msra.mxu0 0.0
        %1675 = vmatprep.subr.mxu0 0.0
        %1676 = vmatpush1.msra.mxu0 0.0
        %1677 = vmatprep.subr.mxu0 0.0
        %1678 = vmatpush1.msra.mxu0 0.0
        %1679 = vmatprep.subr.mxu0 0.0
        %1680 = vmatpush1.msra.mxu0 0.0
        %1681 = vmatprep.subr.mxu0 0.0
        %1682 = vmatpush1.msra.mxu0 0.0
        %1683 = vmatprep.subr.mxu0 0.0
        %1684 = vmatpush1.msra.mxu0 0.0
        %1685 = vmatprep.subr.mxu0 0.0
        %1686 = vmatpush1.msra.mxu0 0.0
        %1687 = vmatprep.subr.mxu0 0.0
        %1688 = vmatpush1.msra.mxu0 %v1288
        %1689 = vmatprep.subr.mxu0 0.0
        %1690 = vmatpush2.msra.mxu0 0.0
        %1691 = vmatprep.subr.mxu0 0.0
        %1692 = vmatpush2.msra.mxu0 0.0
        %1693 = vmatprep.subr.mxu0 0.0
        %1694 = vmatpush2.msra.mxu0 0.0
        %1695 = vmatprep.subr.mxu0 0.0
        %1696 = vmatpush2.msra.mxu0 0.0
        %1697 = vmatprep.subr.mxu0 0.0
        %1698 = vmatpush2.msra.mxu0 0.0
        %1699 = vmatprep.subr.mxu0 0.0
        %1700 = vmatpush2.msra.mxu0 0.0
        %1701 = vmatprep.subr.mxu0 0.0
        %1702 = vmatpush2.msra.mxu0 0.0
        %1703 = vmatprep.subr.mxu0 0.0
        %1704 = vmatpush2.msra.mxu0 0.0
        %1705 = vmatprep.subr.mxu0 0.0
        %1706 = vmatpush2.msra.mxu0 0.0
        %1707 = vmatprep.subr.mxu0 0.0
        %1708 = vmatpush2.msra.mxu0 0.0
        %1709 = vmatprep.subr.mxu0 0.0
        %1710 = vmatpush2.msra.mxu0 0.0
        %1711 = vmatprep.subr.mxu0 0.0
        %1712 = vmatpush2.msra.mxu0 0.0
        %1713 = vmatprep.subr.mxu0 0.0
        %1714 = vmatpush2.msra.mxu0 0.0
        %1715 = vmatprep.subr.mxu0 0.0
        %1716 = vmatpush2.msra.mxu0 0.0
        %1717 = vmatprep.subr.mxu0 0.0
        %1718 = vmatpush2.msra.mxu0 0.0
        %1719 = vmatprep.subr.mxu0 0.0
        %1720 = vmatpush2.msra.mxu0 0.0
        %1721 = vmatprep.mubr.f32.mxu0 0.0
        %1722 = vmatmul.mubr.f32.gmra.mxu0 %v689
        %v1723 = vpop.f32.mrf.mxu0
        %v1724 = vadd.f32 %v1438, %v1723
        %v1725 = vpop.f32.mrf.mxu0
        %1726 = vdwg.mxu0
        %1727 = vmatprep.subr.mxu0 0.0
        %1728 = vmatpush1.msra.mxu0 0.0
        %1729 = vmatprep.subr.mxu0 0.0
        %1730 = vmatpush1.msra.mxu0 0.0
        %1731 = vmatprep.subr.mxu0 0.0
        %1732 = vmatpush1.msra.mxu0 0.0
        %1733 = vmatprep.subr.mxu0 0.0
        %1734 = vmatpush1.msra.mxu0 0.0
        %1735 = vmatprep.subr.mxu0 0.0
        %1736 = vmatpush1.msra.mxu0 0.0
        %1737 = vmatprep.subr.mxu0 0.0
        %1738 = vmatpush1.msra.mxu0 0.0
        %1739 = vmatprep.subr.mxu0 0.0
        %1740 = vmatpush1.msra.mxu0 0.0
        %1741 = vmatprep.subr.mxu0 0.0
        %1742 = vmatpush1.msra.mxu0 0.0
        %1743 = vmatprep.subr.mxu0 0.0
        %1744 = vmatpush1.msra.mxu0 0.0
        %1745 = vmatprep.subr.mxu0 0.0
        %1746 = vmatpush1.msra.mxu0 0.0
        %1747 = vmatprep.subr.mxu0 0.0
        %1748 = vmatpush1.msra.mxu0 0.0
        %1749 = vmatprep.subr.mxu0 0.0
        %1750 = vmatpush1.msra.mxu0 0.0
        %1751 = vmatprep.subr.mxu0 0.0
        %1752 = vmatpush1.msra.mxu0 0.0
        %1753 = vmatprep.subr.mxu0 0.0
        %1754 = vmatpush1.msra.mxu0 0.0
        %1755 = vmatprep.subr.mxu0 0.0
        %1756 = vmatpush1.msra.mxu0 0.0
        %1757 = vmatprep.subr.mxu0 0.0
        %1758 = vmatpush1.msra.mxu0 %v1289
        %1759 = vmatprep.subr.mxu0 0.0
        %1760 = vmatpush2.msra.mxu0 0.0
        %1761 = vmatprep.subr.mxu0 0.0
        %1762 = vmatpush2.msra.mxu0 0.0
        %1763 = vmatprep.subr.mxu0 0.0
        %1764 = vmatpush2.msra.mxu0 0.0
        %1765 = vmatprep.subr.mxu0 0.0
        %1766 = vmatpush2.msra.mxu0 0.0
        %1767 = vmatprep.subr.mxu0 0.0
        %1768 = vmatpush2.msra.mxu0 0.0
        %1769 = vmatprep.subr.mxu0 0.0
        %1770 = vmatpush2.msra.mxu0 0.0
        %1771 = vmatprep.subr.mxu0 0.0
        %1772 = vmatpush2.msra.mxu0 0.0
        %1773 = vmatprep.subr.mxu0 0.0
        %1774 = vmatpush2.msra.mxu0 0.0
        %1775 = vmatprep.subr.mxu0 0.0
        %1776 = vmatpush2.msra.mxu0 0.0
        %1777 = vmatprep.subr.mxu0 0.0
        %1778 = vmatpush2.msra.mxu0 0.0
        %1779 = vmatprep.subr.mxu0 0.0
        %1780 = vmatpush2.msra.mxu0 0.0
        %1781 = vmatprep.subr.mxu0 0.0
        %1782 = vmatpush2.msra.mxu0 0.0
        %1783 = vmatprep.subr.mxu0 0.0
        %1784 = vmatpush2.msra.mxu0 0.0
        %1785 = vmatprep.subr.mxu0 0.0
        %1786 = vmatpush2.msra.mxu0 0.0
        %1787 = vmatprep.subr.mxu0 0.0
        %1788 = vmatpush2.msra.mxu0 0.0
        %1789 = vmatprep.subr.mxu0 0.0
        %1790 = vmatpush2.msra.mxu0 0.0
        %1791 = vmatprep.mubr.f32.mxu0 0.0
        %1792 = vmatmul.mubr.f32.gmra.mxu0 %v765
        %v1793 = vpop.f32.mrf.mxu0
        %v1794 = vadd.f32 %v1511, %v1793
        %v1795 = vpop.f32.mrf.mxu0
        %1796 = vdwg.mxu0
        %1797 = vmatprep.subr.mxu0 0.0
        %1798 = vmatpush1.msra.mxu0 0.0
        %1799 = vmatprep.subr.mxu0 0.0
        %1800 = vmatpush1.msra.mxu0 0.0
        %1801 = vmatprep.subr.mxu0 0.0
        %1802 = vmatpush1.msra.mxu0 0.0
        %1803 = vmatprep.subr.mxu0 0.0
        %1804 = vmatpush1.msra.mxu0 0.0
        %1805 = vmatprep.subr.mxu0 0.0
        %1806 = vmatpush1.msra.mxu0 0.0
        %1807 = vmatprep.subr.mxu0 0.0
        %1808 = vmatpush1.msra.mxu0 0.0
        %1809 = vmatprep.subr.mxu0 0.0
        %1810 = vmatpush1.msra.mxu0 0.0
        %1811 = vmatprep.subr.mxu0 0.0
        %1812 = vmatpush1.msra.mxu0 0.0
        %1813 = vmatprep.subr.mxu0 0.0
        %1814 = vmatpush1.msra.mxu0 0.0
        %1815 = vmatprep.subr.mxu0 0.0
        %1816 = vmatpush1.msra.mxu0 0.0
        %1817 = vmatprep.subr.mxu0 0.0
        %1818 = vmatpush1.msra.mxu0 0.0
        %1819 = vmatprep.subr.mxu0 0.0
        %1820 = vmatpush1.msra.mxu0 0.0
        %1821 = vmatprep.subr.mxu0 0.0
        %1822 = vmatpush1.msra.mxu0 0.0
        %1823 = vmatprep.subr.mxu0 0.0
        %1824 = vmatpush1.msra.mxu0 0.0
        %1825 = vmatprep.subr.mxu0 0.0
        %1826 = vmatpush1.msra.mxu0 0.0
        %1827 = vmatprep.subr.mxu0 0.0
        %1828 = vmatpush1.msra.mxu0 %v1290
        %1829 = vmatprep.subr.mxu0 0.0
        %1830 = vmatpush2.msra.mxu0 0.0
        %1831 = vmatprep.subr.mxu0 0.0
        %1832 = vmatpush2.msra.mxu0 0.0
        %1833 = vmatprep.subr.mxu0 0.0
        %1834 = vmatpush2.msra.mxu0 0.0
        %1835 = vmatprep.subr.mxu0 0.0
        %1836 = vmatpush2.msra.mxu0 0.0
        %1837 = vmatprep.subr.mxu0 0.0
        %1838 = vmatpush2.msra.mxu0 0.0
        %1839 = vmatprep.subr.mxu0 0.0
        %1840 = vmatpush2.msra.mxu0 0.0
        %1841 = vmatprep.subr.mxu0 0.0
        %1842 = vmatpush2.msra.mxu0 0.0
        %1843 = vmatprep.subr.mxu0 0.0
        %1844 = vmatpush2.msra.mxu0 0.0
        %1845 = vmatprep.subr.mxu0 0.0
        %1846 = vmatpush2.msra.mxu0 0.0
        %1847 = vmatprep.subr.mxu0 0.0
        %1848 = vmatpush2.msra.mxu0 0.0
        %1849 = vmatprep.subr.mxu0 0.0
        %1850 = vmatpush2.msra.mxu0 0.0
        %1851 = vmatprep.subr.mxu0 0.0
        %1852 = vmatpush2.msra.mxu0 0.0
        %1853 = vmatprep.subr.mxu0 0.0
        %1854 = vmatpush2.msra.mxu0 0.0
        %1855 = vmatprep.subr.mxu0 0.0
        %1856 = vmatpush2.msra.mxu0 0.0
        %1857 = vmatprep.subr.mxu0 0.0
        %1858 = vmatpush2.msra.mxu0 0.0
        %1859 = vmatprep.subr.mxu0 0.0
        %1860 = vmatpush2.msra.mxu0 0.0
        %1861 = vmatprep.mubr.f32.mxu0 0.0
        %1862 = vmatmul.mubr.f32.gmra.mxu0 %v841
        %v1863 = vpop.f32.mrf.mxu0
        %v1864 = vadd.f32 %v1584, %v1863
        %v1865 = vpop.f32.mrf.mxu0
        %1866 = vdwg.mxu0
        %vm1867 = vcmask 261120
        %v1868 = vsel %vm1867, %v1654, 0.0
        %v1869 = vsel %vm1867, %v1724, 0.0
        %v1870 = vadd.f32 %v1868, %v1869
        %v1871 = vsel %vm1867, %v1794, 0.0
        %v1872 = vadd.f32 %v1870, %v1871
        %v1873 = vsel %vm1867, %v1864, 0.0
        %v1874 = vadd.f32 %v1872, %v1873
        %v1875 = vsel %vm1867, %v1874, 0.0
        %1876 = vadd.xlane.f32.xlu0 %v1875
        %v1877 = vpop.xlane.xlu0 %1876
        %v1878 = vrcp.pop 32.0
        %v1879 = vmul.f32 %v1877, %v1878
        %v1880 = vsub.f32 %v1874, %v1879
        %v1881 = vmul.f32 %v1880, %v1880
        %v1882 = vsel %vm1867, %v1881, 0.0
        %1883 = vadd.xlane.f32.xlu0 %v1882
        %v1884 = vpop.xlane.xlu0 %1883
        %v1885 = vmul.f32 %v1884, %v1878
        %v1886 = vadd.f32 %v1885, 1e-05
        %v1887 = vrsqrt.pop %v1886
        %v1888 = vmul.f32 %v1880, %v1887
        %v1889 = vld [vmem:[%s8] sm:$0x1]
        %v1891 = vlaneseq
        %v1892 = vshrl.u32 %v1891, 7
        %v1893 = vsub.s32 0, %v1892
        %v1894 = vrot.slane %v1889, %v1893
        %v1896 = vmul.f32 %v1888, %v1894
        %v1897 = vld [vmem:[%s9] sm:$0x1]
        %v1899 = vlaneseq
        %v1900 = vshrl.u32 %v1899, 7
        %v1901 = vsub.s32 0, %v1900
        %v1902 = vrot.slane %v1897, %v1901
        %v1904 = vadd.f32 %v1896, %v1902
        %1905 = vst.msk [vmem:[%s588] sm:$0xff] %vm1867, %v1904
        %s1906 = sand.u32 %s301, 1
        %s1907 = scalar_lea.sflag [#allocation5], %s1906
        %s1908 = sand.u32 %s301, 1
        %s1909 = smul.addr %s1908, 8
        %s1910 = scalar_lea.vmem [#allocation14], %s1909
        %s1911 = sand.u32 %s329, 1
        %s1912 = scalar_lea.sflag [#allocation16], %s1911
        %s1913 = sand.u32 %s329, 1
        %s1914 = smul.addr %s1913, 32
        %s1915 = scalar_lea.vmem [#allocation15], %s1914
        // Predicated region
        $region85: #{tpu_custom_call.1} parent=59 // pred_check
          %p1916 = pneg %p311
        $region86: #{tpu_custom_call.1} parent=59 // pred_check_branch
          %1918 = sbr.rel (%p1916) target = $region88
        $region87: #{tpu_custom_call.1} parent=59 // pred_region
          %s1920 = ssub.s32 128, 128
          %1921 = vsyncadd %s1907, %s1920
          %s1922 = sadd.s32 %s45, %s44
          %s1923 = smul.addr %s1922, 128
          %s1924 = scalar_lea.hbm %s10, %s1923
          %s1926 = sshll.u32 %s1910, 4
          %s1927 = int_to_ptr.vmem [resolvable:$true] %s1926
          %1929 = dma.vmem_to_hbm [thread:$0]  %s1927, 128, %s1924, %s1907
        $region88: #{tpu_custom_call.1} parent=59 // pred_fallthru
          _
        // Predicated region
        $region89: #{tpu_custom_call.1} parent=59 // pred_check
          %p1930 = pneg %p339
        $region90: #{tpu_custom_call.1} parent=59 // pred_check_branch
          %1932 = sbr.rel (%p1930) target = $region92
        $region91: #{tpu_custom_call.1} parent=59 // pred_region
          %s1934 = ssub.s32 512, 512
          %1935 = vsyncadd %s1912, %s1934
          %s1936 = smul.addr %s44, 4
          %s1937 = sadd.s32 %s45, %s1936
          %s1938 = smul.addr %s1937, 128
          %s1939 = scalar_lea.hbm %s11, %s1938
          %s1940 = sshll.u32 %s1915, 4
          %s1941 = int_to_ptr.vmem [resolvable:$true] %s1940
          %1946 = dma.vmem_to_hbm [thread:$0]  %s1941, 512, %s1939, %s1912, 128, 128, 8
        $region92: #{tpu_custom_call.1} parent=59 // pred_fallthru
          _
      $region60: #{tpu_custom_call.1} parent=5 // pred_fallthru
        _
      %p1947 = scmp.le.s32.totalorder 2, %s35
      // Predicated region
      $region93: #{tpu_custom_call.1} parent=5 // pred_check
        %p1948 = pneg %p1947
      $region94: #{tpu_custom_call.1} parent=5 // pred_check_branch
        %1950 = sbr.rel (%p1948) target = $region96
      $region95: #{tpu_custom_call.1} parent=5 // pred_region
        %s1951 = ssub.s32 %s35, 2
        // Predicated region
        $region97: #{tpu_custom_call.1} parent=95 // pred_check
          %p1952 = pneg %p317
        $region98: #{tpu_custom_call.1} parent=95 // pred_check_branch
          %1954 = sbr.rel (%p1952) target = $region100
        $region99: #{tpu_custom_call.1} parent=95 // pred_region
          %s1955 = sand.u32 %s302, 1
          %s1956 = scalar_lea.sflag [#allocation5], %s1955
          %s1957 = sand.u32 %s302, 1
          %s1958 = smul.addr %s1957, 8
          %s1959 = scalar_lea.vmem [#allocation14], %s1958
          %1960 = dma.done %s1956, 128
        $region100: #{tpu_custom_call.1} parent=95 // pred_fallthru
          _
        // Predicated region
        $region101: #{tpu_custom_call.1} parent=95 // pred_check
          %p1961 = pneg %p345
        $region102: #{tpu_custom_call.1} parent=95 // pred_check_branch
          %1963 = sbr.rel (%p1961) target = $region104
        $region103: #{tpu_custom_call.1} parent=95 // pred_region
          %s1964 = sand.u32 %s330, 1
          %s1965 = scalar_lea.sflag [#allocation16], %s1964
          %s1966 = sand.u32 %s330, 1
          %s1967 = smul.addr %s1966, 32
          %s1968 = scalar_lea.vmem [#allocation15], %s1967
          %1969 = dma.done %s1965, 512
        $region104: #{tpu_custom_call.1} parent=95 // pred_fallthru
          _
      $region96: #{tpu_custom_call.1} parent=5 // pred_fallthru
        _
    $region6: #{tpu_custom_call.1} parent=1 // loop_footer
      %s39 = sadd.s32 1, %s35
    $region7: #{tpu_custom_call.1} parent=1 // loop_footer_branch
      %34 = sbr.rel target = $region3
    $region8: #{tpu_custom_call.1} parent=1 // loop_exit
      _
    %1970 = vsyncpa [#allocation4], 1
    %s1971 = scalar_lea.sflag [#allocation4], 1
    %1972 = vsyncpa %s1971, 1
    %1973 = vsyncpa [#allocation7], 1
    %s1974 = scalar_lea.sflag [#allocation7], 1
    %1975 = vsyncpa %s1974, 1
    %1976 = vsyncpa [#allocation10], 1
    %s1977 = scalar_lea.sflag [#allocation10], 1
    %1978 = vsyncpa %s1977, 1
    %1979 = vsyncpa [#allocation13], 1
    %1980 = vsyncpa [#allocation5], 1
    %s1981 = scalar_lea.sflag [#allocation5], 1
    %1982 = vsyncpa %s1981, 1
    %1983 = vsyncpa [#allocation16], 1
    %s1984 = scalar_lea.sflag [#allocation16], 1
    %1985 = vsyncpa %s1984, 1

</llo_original>
